<compile_context>
chip_gen: v6e
topology: v6e:2x2x1
jax: 0.10.0
libtpu: 0.0.40
codegen_flags: <defaults>
</compile_context>

<pallas_src>
import functools

import jax
import jax.numpy as jnp
from jax.experimental import pallas as pl
from jax.experimental.pallas import tpu as pltpu


# ----------------------------------------------------------------------------
# Fused InvertedResidual kernel (one batch sample per grid step).
# ----------------------------------------------------------------------------
def _inv_res_kernel(x_ref, w1_ref, b1_ref, wdw_ref, b2_ref, w3_ref, b3_ref,
                    o_ref, hp_ref, *,
                    H, W, Ho, Wo, RB, stride, has_expand, identity):
    hd = hp_ref.shape[-1]                       # hidden_dim (lane axis)

    xm = x_ref[0]                               # (H*W, Cin)  channels-last rows

    # ---- expand: 1x1 conv (MXU, BN scale pre-folded into w1) + bias + ReLU6 --
    if has_expand:
        h = jnp.dot(xm, w1_ref[...], preferred_element_type=jnp.float32)
        h = jnp.clip(h + b1_ref[...], 0.0, 6.0)
    else:
        h = xm.astype(jnp.float32)

    # ---- place h into the zero-padded halo scratch (H+2, W+2, hd) -----------
    # Re-zeroed every grid step: megacore-safe (each core owns its own scratch
    # and may never see grid step 0), and cheap relative to the matmuls.
    hp_ref[...] = jnp.zeros_like(hp_ref)
    hp_ref[1:H + 1, 1:W + 1, :] = h.reshape(H, W, hd)

    wdw = wdw_ref[...]                          # (9, hd)  3x3 taps (BN2-scaled)
    b2 = b2_ref[...]
    w3 = w3_ref[...]                            # (hd, Cout) (BN3-scaled)
    b3 = b3_ref[...]

    # ---- depthwise 3x3 + bias + ReLU6 + project 1x1 + bias (+ residual) -----
    # Processed in strips of RB output rows to keep vreg pressure bounded.
    for s in range(Ho // RB):
        r0 = s * RB
        acc = jnp.zeros((RB, Wo, hd), jnp.float32)
        for ky in range(3):
            for kx in range(3):
                if stride == 1:
                    tap = hp_ref[r0 + ky:r0 + ky + RB, kx:kx + Wo, :]
                else:  # stride == 2: strided reads from the halo scratch
                    tap = hp_ref[pl.ds(r0 * stride + ky, RB, stride),
                                 pl.ds(kx, Wo, stride), :]
                acc = acc + tap * wdw[ky * 3 + kx, :]

        y = jnp.clip(acc.reshape(RB * Wo, hd) + b2, 0.0, 6.0)

        z = jnp.dot(y, w3, preferred_element_type=jnp.float32) + b3
        if identity:                            # only possible when stride == 1
            z = z + xm[r0 * W:(r0 + RB) * W, :]

        o_ref[0, r0 * Wo:(r0 + RB) * Wo, :] = z.astype(o_ref.dtype)


# ----------------------------------------------------------------------------
# Wrapper: layout glue (NCHW <-> channels-last rows), BN folding, pallas_call.
# ----------------------------------------------------------------------------
def inverted_residual_forward(x_nchw, params, *, stride, expand_ratio, eps=1e-5):
    N, Cin, H, W = x_nchw.shape
    has_expand = expand_ratio != 1
    hidden = int(round(Cin * expand_ratio))
    Cout = params["w3"].shape[0]
    identity = (stride == 1 and Cin == Cout)
    Ho = (H + 2 - 3) // stride + 1
    Wo = (W + 2 - 3) // stride + 1
    RB = next(r for r in (8, 4, 2, 1) if Ho % r == 0)   # output-row strip size

    def fold(bn):
        """BN(running stats) -> per-channel (scale, bias)."""
        g, b, m, v = bn
        s = g * jax.lax.rsqrt(v + eps)
        return s, b - m * s

    # Layout plumbing only (no compute on activations, no whole-array padding):
    # NCHW -> channels-last flattened rows (N, H*W, C); weights -> (in, out) with
    # the BN scale folded into the output channels.
    x_rows = jnp.transpose(x_nchw, (0, 2, 3, 1)).reshape(N, H * W, Cin)
    if has_expand:
        s1, b1v = fold(params["bn1"])
        w1 = jnp.transpose(params["w1"] * s1[:, None])            # (Cin, hidden)
        b1 = b1v.reshape(1, hidden)
    else:  # placeholders, never read in-kernel when has_expand=False
        w1 = jnp.zeros((Cin, hidden), jnp.float32)
        b1 = jnp.zeros((1, hidden), jnp.float32)
    s2, b2v = fold(params["bn2"])
    wdw = jnp.transpose(params["wdw"] * s2[:, None, None],
                        (1, 2, 0)).reshape(9, hidden)              # (9, hidden)
    b2 = b2v.reshape(1, hidden)
    s3, b3v = fold(params["bn3"])
    w3 = jnp.transpose(params["w3"] * s3[:, None])                 # (hidden, Cout)
    b3 = b3v.reshape(1, Cout)

    kernel = functools.partial(
        _inv_res_kernel, H=H, W=W, Ho=Ho, Wo=Wo, RB=RB,
        stride=stride, has_expand=has_expand, identity=identity)

    flops = (2 * N * H * W * Cin * hidden * int(has_expand)
             + 2 * N * Ho * Wo * 9 * hidden
             + 2 * N * Ho * Wo * hidden * Cout)
    bytes_accessed = 4 * (x_rows.size + N * Ho * Wo * Cout
                          + w1.size + wdw.size + w3.size
                          + 2 * hidden + hidden + Cout)

    out_rows = pl.pallas_call(
        kernel,
        out_shape=jax.ShapeDtypeStruct((N, Ho * Wo, Cout), x_nchw.dtype),
        grid_spec=pltpu.PrefetchScalarGridSpec(
            num_scalar_prefetch=0,
            grid=(N,),
            in_specs=[
                # per-sample activations
                pl.BlockSpec((1, H * W, Cin), lambda n: (n, 0, 0)),
                # resident weights / folded-BN biases: constant index_map ->
                # DMA'd once and kept in VMEM for the whole grid.
                pl.BlockSpec((Cin, hidden), lambda n: (0, 0)),
                pl.BlockSpec((1, hidden), lambda n: (0, 0)),
                pl.BlockSpec((9, hidden), lambda n: (0, 0)),
                pl.BlockSpec((1, hidden), lambda n: (0, 0)),
                pl.BlockSpec((hidden, Cout), lambda n: (0, 0)),
                pl.BlockSpec((1, Cout), lambda n: (0, 0)),
            ],
            out_specs=pl.BlockSpec((1, Ho * Wo, Cout), lambda n: (n, 0, 0)),
            scratch_shapes=[pltpu.VMEM((H + 2, W + 2, hidden), jnp.float32)],
        ),
        compiler_params=pltpu.CompilerParams(
            dimension_semantics=("parallel",)),
        cost_estimate=pl.CostEstimate(
            flops=flops, transcendentals=0, bytes_accessed=bytes_accessed),
    )(x_rows, w1, b1, wdw, b2, w3, b3)

    out = out_rows.reshape(N, Ho, Wo, Cout)
    return jnp.transpose(out, (0, 3, 1, 2))                      # back to NCHW


# ----------------------------------------------------------------------------
# Parameter init (mirrors the PyTorch module's parameter shapes) + reference.
# ----------------------------------------------------------------------------
def _bn_params(key, dim):
    k1, k2, k3, k4 = jax.random.split(key, 4)
    gamma = jax.random.uniform(k1, (dim,), jnp.float32, 0.5, 1.5)
    beta = 0.1 * jax.random.normal(k2, (dim,), jnp.float32)
    mean = 0.1 * jax.random.normal(k3, (dim,), jnp.float32)
    var = jax.random.uniform(k4, (dim,), jnp.float32, 0.5, 1.5)
    return gamma, beta, mean, var


def init_inverted_residual_params(key, inp, oup, expand_ratio):
    hidden = int(round(inp * expand_ratio))
    k1, k2, k3, k4, k5, k6 = jax.random.split(key, 6)
    p = {}
    if expand_ratio != 1:
        p["w1"] = 0.1 * jax.random.normal(k1, (hidden, inp), jnp.float32)  # 1x1 conv
        p["bn1"] = _bn_params(k2, hidden)
    p["wdw"] = 0.1 * jax.random.normal(k3, (hidden, 3, 3), jnp.float32)    # depthwise
    p["bn2"] = _bn_params(k4, hidden)
    p["w3"] = 0.1 * jax.random.normal(k5, (oup, hidden), jnp.float32)      # 1x1 conv
    p["bn3"] = _bn_params(k6, oup)
    return p


def inverted_residual_reference(x, params, *, stride, expand_ratio, eps=1e-5):
    """Pure-JAX mirror of the PyTorch forward (eval-mode BN)."""
    N, Cin, H, W = x.shape
    has_expand = expand_ratio != 1
    hidden = int(round(Cin * expand_ratio))
    Cout = params["w3"].shape[0]
    identity = (stride == 1 and Cin == Cout)
    hi = jax.lax.Precision.HIGHEST

    def bn(y, bnp):
        g, b, m, v = bnp
        inv = (g / jnp.sqrt(v + eps))[None, :, None, None]
        return (y - m[None, :, None, None]) * inv + b[None, :, None, None]

    y = x
    if has_expand:
        y = jnp.einsum("nchw,oc->nohw", y, params["w1"], precision=hi)
        y = jnp.clip(bn(y, params["bn1"]), 0.0, 6.0)
    y = jax.lax.conv_general_dilated(
        y, params["wdw"][:, None, :, :],
        window_strides=(stride, stride), padding=((1, 1), (1, 1)),
        feature_group_count=hidden,
        dimension_numbers=("NCHW", "OIHW", "NCHW"), precision=hi)
    y = jnp.clip(bn(y, params["bn2"]), 0.0, 6.0)
    y = jnp.einsum("nchw,oc->nohw", y, params["w3"], precision=hi)
    y = bn(y, params["bn3"])
    if identity:
        y = y + x
    return y


if __name__ == "__main__":
    key = jax.random.PRNGKey(0)
    kx, kp = jax.random.split(key)

    # Small shapes; expand_ratio=4 -> hidden_dim=128 (lane-dense), stride=1 with
    # inp==oup exercises the residual branch.
    N, inp, oup, H, W = 2, 32, 32, 16, 16
    stride, expand_ratio = 1, 4

    x = jax.random.normal(kx, (N, inp, H, W), dtype=jnp.float32)
    params = init_inverted_residual_params(kp, inp, oup, expand_ratio)

    fwd = jax.jit(functools.partial(inverted_residual_forward,
                                    stride=stride, expand_ratio=expand_ratio))
    out = jax.block_until_ready(fwd(x, params))

    ref = inverted_residual_reference(x, params, stride=stride,
                                      expand_ratio=expand_ratio)
    assert out.shape == ref.shape, (out.shape, ref.shape)
    max_err = float(jnp.max(jnp.abs(out - ref)))
    assert jnp.allclose(out, ref, atol=2e-3, rtol=2e-3), f"mismatch: {max_err}"

    print("KERNEL_OK")
</pallas_src>

<mosaic_0001>
module attributes {stable_mosaic.version = 11 : i64} {
  func.func @_inv_res_kernel(%arg0: i32, %arg1: memref<1x256x32xf32, #tpu.memory_space<vmem>>, %arg2: memref<32x128xf32, #tpu.memory_space<vmem>>, %arg3: memref<1x128xf32, #tpu.memory_space<vmem>>, %arg4: memref<9x128xf32, #tpu.memory_space<vmem>>, %arg5: memref<1x128xf32, #tpu.memory_space<vmem>>, %arg6: memref<128x32xf32, #tpu.memory_space<vmem>>, %arg7: memref<1x32xf32, #tpu.memory_space<vmem>>, %arg8: memref<1x256x32xf32, #tpu.memory_space<vmem>>, %arg9: memref<18x18x128xf32, #tpu.memory_space<vmem>>) attributes {dimension_semantics = [#tpu.dimension_semantics<parallel>], iteration_bounds = array<i64: 2>, scalar_prefetch = 0 : i64, scratch_operands = 1 : i64, tpu.core_type = #tpu.core_type<tc>, window_params = [{transform_indices = @transform_0, window_bounds = array<i64: 1, 256, 32>}, {pipeline_mode = #tpu.pipeline_mode<synchronous>, transform_indices = @transform_1, window_bounds = array<i64: 32, 128>}, {pipeline_mode = #tpu.pipeline_mode<synchronous>, transform_indices = @transform_2, window_bounds = array<i64: 1, 128>}, {pipeline_mode = #tpu.pipeline_mode<synchronous>, transform_indices = @transform_3, window_bounds = array<i64: 9, 128>}, {pipeline_mode = #tpu.pipeline_mode<synchronous>, transform_indices = @transform_4, window_bounds = array<i64: 1, 128>}, {pipeline_mode = #tpu.pipeline_mode<synchronous>, transform_indices = @transform_5, window_bounds = array<i64: 128, 32>}, {pipeline_mode = #tpu.pipeline_mode<synchronous>, transform_indices = @transform_6, window_bounds = array<i64: 1, 32>}, {transform_indices = @transform_7, window_bounds = array<i64: 1, 256, 32>}]} {
    %c0 = arith.constant 0 : index
    %c0_0 = arith.constant 0 : index
    %c0_1 = arith.constant 0 : index
    %0 = vector.load %arg1[%c0, %c0_0, %c0_1] : memref<1x256x32xf32, #tpu.memory_space<vmem>>, vector<1x256x32xf32>
    %1 = vector.shape_cast %0 : vector<1x256x32xf32> to vector<256x32xf32>
    %c0_2 = arith.constant 0 : index
    %c0_3 = arith.constant 0 : index
    %2 = vector.load %arg2[%c0_2, %c0_3] : memref<32x128xf32, #tpu.memory_space<vmem>>, vector<32x128xf32>
    %cst = arith.constant dense<0.000000e+00> : vector<256x128xf32>
    %3 = tpu.matmul %1, %2, %cst {dimension_numbers = #tpu.dot_dimension_numbers<[1], [0], [0], [1], [0, 0, 1, 1], [], []>} : vector<256x32xf32>, vector<32x128xf32>, vector<256x128xf32> -> vector<256x128xf32>
    %c0_4 = arith.constant 0 : index
    %c0_5 = arith.constant 0 : index
    %4 = vector.load %arg3[%c0_4, %c0_5] : memref<1x128xf32, #tpu.memory_space<vmem>>, vector<1x128xf32>
    %5 = vector.broadcast %4 : vector<1x128xf32> to vector<256x128xf32>
    %6 = arith.addf %3, %5 : vector<256x128xf32>
    %cst_6 = arith.constant 0.000000e+00 : f32
    %cst_7 = arith.constant 6.000000e+00 : f32
    %7 = vector.broadcast %cst_6 : f32 to vector<256x128xf32>
    %8 = arith.maximumf %7, %6 : vector<256x128xf32>
    %9 = vector.broadcast %cst_7 : f32 to vector<256x128xf32>
    %10 = arith.minimumf %9, %8 : vector<256x128xf32>
    %cst_8 = arith.constant 0.000000e+00 : f32
    %11 = vector.broadcast %cst_8 : f32 to vector<18x18x128xf32>
    %c0_9 = arith.constant 0 : index
    %c0_10 = arith.constant 0 : index
    %c0_11 = arith.constant 0 : index
    %12 = vector.load %arg9[%c0_9, %c0_10, %c0_11] : memref<18x18x128xf32, #tpu.memory_space<vmem>>, vector<18x18x128xf32>
    tpu.vector_store %arg9[%c0_9, %c0_10, %c0_11], %11 {strides = array<i32>} : memref<18x18x128xf32, #tpu.memory_space<vmem>>, vector<18x18x128xf32>,
    %13 = vector.shape_cast %10 : vector<256x128xf32> to vector<16x16x128xf32>
    %c1 = arith.constant 1 : index
    %c1_12 = arith.constant 1 : index
    %c0_13 = arith.constant 0 : index
    %14 = vector.load %arg9[%c1, %c1_12, %c0_13] : memref<18x18x128xf32, #tpu.memory_space<vmem>>, vector<16x16x128xf32>
    tpu.vector_store %arg9[%c1, %c1_12, %c0_13], %13 {strides = array<i32>} : memref<18x18x128xf32, #tpu.memory_space<vmem>>, vector<16x16x128xf32>,
    %c0_14 = arith.constant 0 : index
    %c0_15 = arith.constant 0 : index
    %15 = vector.load %arg4[%c0_14, %c0_15] : memref<9x128xf32, #tpu.memory_space<vmem>>, vector<9x128xf32>
    %c0_16 = arith.constant 0 : index
    %c0_17 = arith.constant 0 : index
    %16 = vector.load %arg5[%c0_16, %c0_17] : memref<1x128xf32, #tpu.memory_space<vmem>>, vector<1x128xf32>
    %c0_18 = arith.constant 0 : index
    %c0_19 = arith.constant 0 : index
    %17 = vector.load %arg6[%c0_18, %c0_19] : memref<128x32xf32, #tpu.memory_space<vmem>>, vector<128x32xf32>
    %c0_20 = arith.constant 0 : index
    %c0_21 = arith.constant 0 : index
    %18 = vector.load %arg7[%c0_20, %c0_21] : memref<1x32xf32, #tpu.memory_space<vmem>>, vector<1x32xf32>
    %cst_22 = arith.constant 0.000000e+00 : f32
    %19 = vector.broadcast %cst_22 : f32 to vector<8x16x128xf32>
    %c0_23 = arith.constant 0 : index
    %c0_24 = arith.constant 0 : index
    %c0_25 = arith.constant 0 : index
    %20 = vector.load %arg9[%c0_23, %c0_24, %c0_25] : memref<18x18x128xf32, #tpu.memory_space<vmem>>, vector<8x16x128xf32>
    %21 = vector.extract_strided_slice %15 {offsets = [0, 0], sizes = [1, 128], strides = [1, 1]} : vector<9x128xf32> to vector<1x128xf32>
    %22 = vector.shape_cast %21 : vector<1x128xf32> to vector<128xf32>
    %23 = vector.shape_cast %22 : vector<128xf32> to vector<1x1x128xf32>
    %24 = vector.broadcast %23 : vector<1x1x128xf32> to vector<8x16x128xf32>
    %25 = arith.mulf %20, %24 : vector<8x16x128xf32>
    %26 = arith.addf %19, %25 : vector<8x16x128xf32>
    %c0_26 = arith.constant 0 : index
    %c1_27 = arith.constant 1 : index
    %c0_28 = arith.constant 0 : index
    %27 = vector.load %arg9[%c0_26, %c1_27, %c0_28] : memref<18x18x128xf32, #tpu.memory_space<vmem>>, vector<8x16x128xf32>
    %28 = vector.extract_strided_slice %15 {offsets = [1, 0], sizes = [1, 128], strides = [1, 1]} : vector<9x128xf32> to vector<1x128xf32>
    %29 = vector.shape_cast %28 : vector<1x128xf32> to vector<128xf32>
    %30 = vector.shape_cast %29 : vector<128xf32> to vector<1x1x128xf32>
    %31 = vector.broadcast %30 : vector<1x1x128xf32> to vector<8x16x128xf32>
    %32 = arith.mulf %27, %31 : vector<8x16x128xf32>
    %33 = arith.addf %26, %32 : vector<8x16x128xf32>
    %c0_29 = arith.constant 0 : index
    %c2 = arith.constant 2 : index
    %c0_30 = arith.constant 0 : index
    %34 = vector.load %arg9[%c0_29, %c2, %c0_30] : memref<18x18x128xf32, #tpu.memory_space<vmem>>, vector<8x16x128xf32>
    %35 = vector.extract_strided_slice %15 {offsets = [2, 0], sizes = [1, 128], strides = [1, 1]} : vector<9x128xf32> to vector<1x128xf32>
    %36 = vector.shape_cast %35 : vector<1x128xf32> to vector<128xf32>
    %37 = vector.shape_cast %36 : vector<128xf32> to vector<1x1x128xf32>
    %38 = vector.broadcast %37 : vector<1x1x128xf32> to vector<8x16x128xf32>
    %39 = arith.mulf %34, %38 : vector<8x16x128xf32>
    %40 = arith.addf %33, %39 : vector<8x16x128xf32>
    %c1_31 = arith.constant 1 : index
    %c0_32 = arith.constant 0 : index
    %c0_33 = arith.constant 0 : index
    %41 = vector.load %arg9[%c1_31, %c0_32, %c0_33] : memref<18x18x128xf32, #tpu.memory_space<vmem>>, vector<8x16x128xf32>
    %42 = vector.extract_strided_slice %15 {offsets = [3, 0], sizes = [1, 128], strides = [1, 1]} : vector<9x128xf32> to vector<1x128xf32>
    %43 = vector.shape_cast %42 : vector<1x128xf32> to vector<128xf32>
    %44 = vector.shape_cast %43 : vector<128xf32> to vector<1x1x128xf32>
    %45 = vector.broadcast %44 : vector<1x1x128xf32> to vector<8x16x128xf32>
    %46 = arith.mulf %41, %45 : vector<8x16x128xf32>
    %47 = arith.addf %40, %46 : vector<8x16x128xf32>
    %c1_34 = arith.constant 1 : index
    %c1_35 = arith.constant 1 : index
    %c0_36 = arith.constant 0 : index
    %48 = vector.load %arg9[%c1_34, %c1_35, %c0_36] : memref<18x18x128xf32, #tpu.memory_space<vmem>>, vector<8x16x128xf32>
    %49 = vector.extract_strided_slice %15 {offsets = [4, 0], sizes = [1, 128], strides = [1, 1]} : vector<9x128xf32> to vector<1x128xf32>
    %50 = vector.shape_cast %49 : vector<1x128xf32> to vector<128xf32>
    %51 = vector.shape_cast %50 : vector<128xf32> to vector<1x1x128xf32>
    %52 = vector.broadcast %51 : vector<1x1x128xf32> to vector<8x16x128xf32>
    %53 = arith.mulf %48, %52 : vector<8x16x128xf32>
    %54 = arith.addf %47, %53 : vector<8x16x128xf32>
    %c1_37 = arith.constant 1 : index
    %c2_38 = arith.constant 2 : index
    %c0_39 = arith.constant 0 : index
    %55 = vector.load %arg9[%c1_37, %c2_38, %c0_39] : memref<18x18x128xf32, #tpu.memory_space<vmem>>, vector<8x16x128xf32>
    %56 = vector.extract_strided_slice %15 {offsets = [5, 0], sizes = [1, 128], strides = [1, 1]} : vector<9x128xf32> to vector<1x128xf32>
    %57 = vector.shape_cast %56 : vector<1x128xf32> to vector<128xf32>
    %58 = vector.shape_cast %57 : vector<128xf32> to vector<1x1x128xf32>
    %59 = vector.broadcast %58 : vector<1x1x128xf32> to vector<8x16x128xf32>
    %60 = arith.mulf %55, %59 : vector<8x16x128xf32>
    %61 = arith.addf %54, %60 : vector<8x16x128xf32>
    %c2_40 = arith.constant 2 : index
    %c0_41 = arith.constant 0 : index
    %c0_42 = arith.constant 0 : index
    %62 = vector.load %arg9[%c2_40, %c0_41, %c0_42] : memref<18x18x128xf32, #tpu.memory_space<vmem>>, vector<8x16x128xf32>
    %63 = vector.extract_strided_slice %15 {offsets = [6, 0], sizes = [1, 128], strides = [1, 1]} : vector<9x128xf32> to vector<1x128xf32>
    %64 = vector.shape_cast %63 : vector<1x128xf32> to vector<128xf32>
    %65 = vector.shape_cast %64 : vector<128xf32> to vector<1x1x128xf32>
    %66 = vector.broadcast %65 : vector<1x1x128xf32> to vector<8x16x128xf32>
    %67 = arith.mulf %62, %66 : vector<8x16x128xf32>
    %68 = arith.addf %61, %67 : vector<8x16x128xf32>
    %c2_43 = arith.constant 2 : index
    %c1_44 = arith.constant 1 : index
    %c0_45 = arith.constant 0 : index
    %69 = vector.load %arg9[%c2_43, %c1_44, %c0_45] : memref<18x18x128xf32, #tpu.memory_space<vmem>>, vector<8x16x128xf32>
    %70 = vector.extract_strided_slice %15 {offsets = [7, 0], sizes = [1, 128], strides = [1, 1]} : vector<9x128xf32> to vector<1x128xf32>
    %71 = vector.shape_cast %70 : vector<1x128xf32> to vector<128xf32>
    %72 = vector.shape_cast %71 : vector<128xf32> to vector<1x1x128xf32>
    %73 = vector.broadcast %72 : vector<1x1x128xf32> to vector<8x16x128xf32>
    %74 = arith.mulf %69, %73 : vector<8x16x128xf32>
    %75 = arith.addf %68, %74 : vector<8x16x128xf32>
    %c2_46 = arith.constant 2 : index
    %c2_47 = arith.constant 2 : index
    %c0_48 = arith.constant 0 : index
    %76 = vector.load %arg9[%c2_46, %c2_47, %c0_48] : memref<18x18x128xf32, #tpu.memory_space<vmem>>, vector<8x16x128xf32>
    %77 = vector.extract_strided_slice %15 {offsets = [8, 0], sizes = [1, 128], strides = [1, 1]} : vector<9x128xf32> to vector<1x128xf32>
    %78 = vector.shape_cast %77 : vector<1x128xf32> to vector<128xf32>
    %79 = vector.shape_cast %78 : vector<128xf32> to vector<1x1x128xf32>
    %80 = vector.broadcast %79 : vector<1x1x128xf32> to vector<8x16x128xf32>
    %81 = arith.mulf %76, %80 : vector<8x16x128xf32>
    %82 = arith.addf %75, %81 : vector<8x16x128xf32>
    %83 = vector.shape_cast %82 : vector<8x16x128xf32> to vector<128x128xf32>
    %84 = vector.broadcast %16 : vector<1x128xf32> to vector<128x128xf32>
    %85 = arith.addf %83, %84 : vector<128x128xf32>
    %cst_49 = arith.constant 0.000000e+00 : f32
    %cst_50 = arith.constant 6.000000e+00 : f32
    %86 = vector.broadcast %cst_49 : f32 to vector<128x128xf32>
    %87 = arith.maximumf %86, %85 : vector<128x128xf32>
    %88 = vector.broadcast %cst_50 : f32 to vector<128x128xf32>
    %89 = arith.minimumf %88, %87 : vector<128x128xf32>
    %cst_51 = arith.constant dense<0.000000e+00> : vector<128x32xf32>
    %90 = tpu.matmul %89, %17, %cst_51 {dimension_numbers = #tpu.dot_dimension_numbers<[1], [0], [0], [1], [0, 0, 1, 1], [], []>} : vector<128x128xf32>, vector<128x32xf32>, vector<128x32xf32> -> vector<128x32xf32>
    %91 = vector.broadcast %18 : vector<1x32xf32> to vector<128x32xf32>
    %92 = arith.addf %90, %91 : vector<128x32xf32>
    %93 = vector.extract_strided_slice %1 {offsets = [0, 0], sizes = [128, 32], strides = [1, 1]} : vector<256x32xf32> to vector<128x32xf32>
    %94 = arith.addf %92, %93 : vector<128x32xf32>
    %c0_52 = arith.constant 0 : index
    %c0_53 = arith.constant 0 : index
    %c0_54 = arith.constant 0 : index
    %95 = vector.load %arg8[%c0_52, %c0_53, %c0_54] : memref<1x256x32xf32, #tpu.memory_space<vmem>>, vector<1x128x32xf32>
    %96 = vector.shape_cast %95 : vector<1x128x32xf32> to vector<128x32xf32>
    %97 = vector.shape_cast %94 : vector<128x32xf32> to vector<1x128x32xf32>
    tpu.vector_store %arg8[%c0_52, %c0_53, %c0_54], %97 {strides = array<i32>} : memref<1x256x32xf32, #tpu.memory_space<vmem>>, vector<1x128x32xf32>,
    %cst_55 = arith.constant 0.000000e+00 : f32
    %98 = vector.broadcast %cst_55 : f32 to vector<8x16x128xf32>
    %c8 = arith.constant 8 : index
    %c0_56 = arith.constant 0 : index
    %c0_57 = arith.constant 0 : index
    %99 = vector.load %arg9[%c8, %c0_56, %c0_57] : memref<18x18x128xf32, #tpu.memory_space<vmem>>, vector<8x16x128xf32>
    %100 = vector.extract_strided_slice %15 {offsets = [0, 0], sizes = [1, 128], strides = [1, 1]} : vector<9x128xf32> to vector<1x128xf32>
    %101 = vector.shape_cast %100 : vector<1x128xf32> to vector<128xf32>
    %102 = vector.shape_cast %101 : vector<128xf32> to vector<1x1x128xf32>
    %103 = vector.broadcast %102 : vector<1x1x128xf32> to vector<8x16x128xf32>
    %104 = arith.mulf %99, %103 : vector<8x16x128xf32>
    %105 = arith.addf %98, %104 : vector<8x16x128xf32>
    %c8_58 = arith.constant 8 : index
    %c1_59 = arith.constant 1 : index
    %c0_60 = arith.constant 0 : index
    %106 = vector.load %arg9[%c8_58, %c1_59, %c0_60] : memref<18x18x128xf32, #tpu.memory_space<vmem>>, vector<8x16x128xf32>
    %107 = vector.extract_strided_slice %15 {offsets = [1, 0], sizes = [1, 128], strides = [1, 1]} : vector<9x128xf32> to vector<1x128xf32>
    %108 = vector.shape_cast %107 : vector<1x128xf32> to vector<128xf32>
    %109 = vector.shape_cast %108 : vector<128xf32> to vector<1x1x128xf32>
    %110 = vector.broadcast %109 : vector<1x1x128xf32> to vector<8x16x128xf32>
    %111 = arith.mulf %106, %110 : vector<8x16x128xf32>
    %112 = arith.addf %105, %111 : vector<8x16x128xf32>
    %c8_61 = arith.constant 8 : index
    %c2_62 = arith.constant 2 : index
    %c0_63 = arith.constant 0 : index
    %113 = vector.load %arg9[%c8_61, %c2_62, %c0_63] : memref<18x18x128xf32, #tpu.memory_space<vmem>>, vector<8x16x128xf32>
    %114 = vector.extract_strided_slice %15 {offsets = [2, 0], sizes = [1, 128], strides = [1, 1]} : vector<9x128xf32> to vector<1x128xf32>
    %115 = vector.shape_cast %114 : vector<1x128xf32> to vector<128xf32>
    %116 = vector.shape_cast %115 : vector<128xf32> to vector<1x1x128xf32>
    %117 = vector.broadcast %116 : vector<1x1x128xf32> to vector<8x16x128xf32>
    %118 = arith.mulf %113, %117 : vector<8x16x128xf32>
    %119 = arith.addf %112, %118 : vector<8x16x128xf32>
    %c9 = arith.constant 9 : index
    %c0_64 = arith.constant 0 : index
    %c0_65 = arith.constant 0 : index
    %120 = vector.load %arg9[%c9, %c0_64, %c0_65] : memref<18x18x128xf32, #tpu.memory_space<vmem>>, vector<8x16x128xf32>
    %121 = vector.extract_strided_slice %15 {offsets = [3, 0], sizes = [1, 128], strides = [1, 1]} : vector<9x128xf32> to vector<1x128xf32>
    %122 = vector.shape_cast %121 : vector<1x128xf32> to vector<128xf32>
    %123 = vector.shape_cast %122 : vector<128xf32> to vector<1x1x128xf32>
    %124 = vector.broadcast %123 : vector<1x1x128xf32> to vector<8x16x128xf32>
    %125 = arith.mulf %120, %124 : vector<8x16x128xf32>
    %126 = arith.addf %119, %125 : vector<8x16x128xf32>
    %c9_66 = arith.constant 9 : index
    %c1_67 = arith.constant 1 : index
    %c0_68 = arith.constant 0 : index
    %127 = vector.load %arg9[%c9_66, %c1_67, %c0_68] : memref<18x18x128xf32, #tpu.memory_space<vmem>>, vector<8x16x128xf32>
    %128 = vector.extract_strided_slice %15 {offsets = [4, 0], sizes = [1, 128], strides = [1, 1]} : vector<9x128xf32> to vector<1x128xf32>
    %129 = vector.shape_cast %128 : vector<1x128xf32> to vector<128xf32>
    %130 = vector.shape_cast %129 : vector<128xf32> to vector<1x1x128xf32>
    %131 = vector.broadcast %130 : vector<1x1x128xf32> to vector<8x16x128xf32>
    %132 = arith.mulf %127, %131 : vector<8x16x128xf32>
    %133 = arith.addf %126, %132 : vector<8x16x128xf32>
    %c9_69 = arith.constant 9 : index
    %c2_70 = arith.constant 2 : index
    %c0_71 = arith.constant 0 : index
    %134 = vector.load %arg9[%c9_69, %c2_70, %c0_71] : memref<18x18x128xf32, #tpu.memory_space<vmem>>, vector<8x16x128xf32>
    %135 = vector.extract_strided_slice %15 {offsets = [5, 0], sizes = [1, 128], strides = [1, 1]} : vector<9x128xf32> to vector<1x128xf32>
    %136 = vector.shape_cast %135 : vector<1x128xf32> to vector<128xf32>
    %137 = vector.shape_cast %136 : vector<128xf32> to vector<1x1x128xf32>
    %138 = vector.broadcast %137 : vector<1x1x128xf32> to vector<8x16x128xf32>
    %139 = arith.mulf %134, %138 : vector<8x16x128xf32>
    %140 = arith.addf %133, %139 : vector<8x16x128xf32>
    %c10 = arith.constant 10 : index
    %c0_72 = arith.constant 0 : index
    %c0_73 = arith.constant 0 : index
    %141 = vector.load %arg9[%c10, %c0_72, %c0_73] : memref<18x18x128xf32, #tpu.memory_space<vmem>>, vector<8x16x128xf32>
    %142 = vector.extract_strided_slice %15 {offsets = [6, 0], sizes = [1, 128], strides = [1, 1]} : vector<9x128xf32> to vector<1x128xf32>
    %143 = vector.shape_cast %142 : vector<1x128xf32> to vector<128xf32>
    %144 = vector.shape_cast %143 : vector<128xf32> to vector<1x1x128xf32>
    %145 = vector.broadcast %144 : vector<1x1x128xf32> to vector<8x16x128xf32>
    %146 = arith.mulf %141, %145 : vector<8x16x128xf32>
    %147 = arith.addf %140, %146 : vector<8x16x128xf32>
    %c10_74 = arith.constant 10 : index
    %c1_75 = arith.constant 1 : index
    %c0_76 = arith.constant 0 : index
    %148 = vector.load %arg9[%c10_74, %c1_75, %c0_76] : memref<18x18x128xf32, #tpu.memory_space<vmem>>, vector<8x16x128xf32>
    %149 = vector.extract_strided_slice %15 {offsets = [7, 0], sizes = [1, 128], strides = [1, 1]} : vector<9x128xf32> to vector<1x128xf32>
    %150 = vector.shape_cast %149 : vector<1x128xf32> to vector<128xf32>
    %151 = vector.shape_cast %150 : vector<128xf32> to vector<1x1x128xf32>
    %152 = vector.broadcast %151 : vector<1x1x128xf32> to vector<8x16x128xf32>
    %153 = arith.mulf %148, %152 : vector<8x16x128xf32>
    %154 = arith.addf %147, %153 : vector<8x16x128xf32>
    %c10_77 = arith.constant 10 : index
    %c2_78 = arith.constant 2 : index
    %c0_79 = arith.constant 0 : index
    %155 = vector.load %arg9[%c10_77, %c2_78, %c0_79] : memref<18x18x128xf32, #tpu.memory_space<vmem>>, vector<8x16x128xf32>
    %156 = vector.extract_strided_slice %15 {offsets = [8, 0], sizes = [1, 128], strides = [1, 1]} : vector<9x128xf32> to vector<1x128xf32>
    %157 = vector.shape_cast %156 : vector<1x128xf32> to vector<128xf32>
    %158 = vector.shape_cast %157 : vector<128xf32> to vector<1x1x128xf32>
    %159 = vector.broadcast %158 : vector<1x1x128xf32> to vector<8x16x128xf32>
    %160 = arith.mulf %155, %159 : vector<8x16x128xf32>
    %161 = arith.addf %154, %160 : vector<8x16x128xf32>
    %162 = vector.shape_cast %161 : vector<8x16x128xf32> to vector<128x128xf32>
    %163 = vector.broadcast %16 : vector<1x128xf32> to vector<128x128xf32>
    %164 = arith.addf %162, %163 : vector<128x128xf32>
    %cst_80 = arith.constant 0.000000e+00 : f32
    %cst_81 = arith.constant 6.000000e+00 : f32
    %165 = vector.broadcast %cst_80 : f32 to vector<128x128xf32>
    %166 = arith.maximumf %165, %164 : vector<128x128xf32>
    %167 = vector.broadcast %cst_81 : f32 to vector<128x128xf32>
    %168 = arith.minimumf %167, %166 : vector<128x128xf32>
    %cst_82 = arith.constant dense<0.000000e+00> : vector<128x32xf32>
    %169 = tpu.matmul %168, %17, %cst_82 {dimension_numbers = #tpu.dot_dimension_numbers<[1], [0], [0], [1], [0, 0, 1, 1], [], []>} : vector<128x128xf32>, vector<128x32xf32>, vector<128x32xf32> -> vector<128x32xf32>
    %170 = vector.broadcast %18 : vector<1x32xf32> to vector<128x32xf32>
    %171 = arith.addf %169, %170 : vector<128x32xf32>
    %172 = vector.extract_strided_slice %1 {offsets = [128, 0], sizes = [128, 32], strides = [1, 1]} : vector<256x32xf32> to vector<128x32xf32>
    %173 = arith.addf %171, %172 : vector<128x32xf32>
    %c0_83 = arith.constant 0 : index
    %c128 = arith.constant 128 : index
    %c0_84 = arith.constant 0 : index
    %174 = vector.load %arg8[%c0_83, %c128, %c0_84] : memref<1x256x32xf32, #tpu.memory_space<vmem>>, vector<1x128x32xf32>
    %175 = vector.shape_cast %174 : vector<1x128x32xf32> to vector<128x32xf32>
    %176 = vector.shape_cast %173 : vector<128x32xf32> to vector<1x128x32xf32>
    tpu.vector_store %arg8[%c0_83, %c128, %c0_84], %176 {strides = array<i32>} : memref<1x256x32xf32, #tpu.memory_space<vmem>>, vector<1x128x32xf32>,
    return
  }
  func.func @transform_0(%arg0: i32) -> (i32, i32, i32) {
    %c0_i32 = arith.constant 0 : i32
    %c0_i32_0 = arith.constant 0 : i32
    %c0_i32_1 = arith.constant 0 : i32
    return %arg0, %c0_i32, %c0_i32_0 : i32, i32, i32
  }
  func.func @transform_1(%arg0: i32) -> (i32, i32) {
    %c0_i32 = arith.constant 0 : i32
    %c0_i32_0 = arith.constant 0 : i32
    %c0_i32_1 = arith.constant 0 : i32
    return %c0_i32, %c0_i32_0 : i32, i32
  }
  func.func @transform_2(%arg0: i32) -> (i32, i32) {
    %c0_i32 = arith.constant 0 : i32
    %c0_i32_0 = arith.constant 0 : i32
    %c0_i32_1 = arith.constant 0 : i32
    return %c0_i32, %c0_i32_0 : i32, i32
  }
  func.func @transform_3(%arg0: i32) -> (i32, i32) {
    %c0_i32 = arith.constant 0 : i32
    %c0_i32_0 = arith.constant 0 : i32
    %c0_i32_1 = arith.constant 0 : i32
    return %c0_i32, %c0_i32_0 : i32, i32
  }
  func.func @transform_4(%arg0: i32) -> (i32, i32) {
    %c0_i32 = arith.constant 0 : i32
    %c0_i32_0 = arith.constant 0 : i32
    %c0_i32_1 = arith.constant 0 : i32
    return %c0_i32, %c0_i32_0 : i32, i32
  }
  func.func @transform_5(%arg0: i32) -> (i32, i32) {
    %c0_i32 = arith.constant 0 : i32
    %c0_i32_0 = arith.constant 0 : i32
    %c0_i32_1 = arith.constant 0 : i32
    return %c0_i32, %c0_i32_0 : i32, i32
  }
  func.func @transform_6(%arg0: i32) -> (i32, i32) {
    %c0_i32 = arith.constant 0 : i32
    %c0_i32_0 = arith.constant 0 : i32
    %c0_i32_1 = arith.constant 0 : i32
    return %c0_i32, %c0_i32_0 : i32, i32
  }
  func.func @transform_7(%arg0: i32) -> (i32, i32, i32) {
    %c0_i32 = arith.constant 0 : i32
    %c0_i32_0 = arith.constant 0 : i32
    %c0_i32_1 = arith.constant 0 : i32
    return %arg0, %c0_i32, %c0_i32_0 : i32, i32, i32
  }
}

</mosaic_0001>

<llo_original>
// kernel: inverted_residual_forward.1
$region0: #{inverted_residual_forward.1}
  #allocation0 [shape = 'u32[]', space=smem, size = 0x4, offset = 0x4, fixed_abs, tag = 'smem constant byte address 0x4 - core index']
  #allocation1 [shape = 'u32[144,128]{1,0:T(1,128)}', space=vmem, size = 0x12000, scoped, tag = 'internal scratch']
  #allocation2 [shape = 'f32[18,18,128]{2,1,0:T(8,128)}', space=vmem, size = 0x36000, scoped, tag = 'scratch operand']
  %s0 = inlined_call_operand.vmem [shape: f32[2,256,32], index: 0, kind: input, shape index: {}]
  %s1 = inlined_call_operand.vmem [shape: f32[32,128], index: 1, kind: input, shape index: {}]
  %s2 = inlined_call_operand.vmem [shape: f32[1,128], index: 2, kind: input, shape index: {}]
  %s3 = inlined_call_operand.vmem [shape: f32[9,128], index: 3, kind: input, shape index: {}]
  %s4 = inlined_call_operand.vmem [shape: f32[1,128], index: 4, kind: input, shape index: {}]
  %s5 = inlined_call_operand.vmem [shape: f32[128,32], index: 5, kind: input, shape index: {}]
  %s6 = inlined_call_operand.vmem [shape: f32[1,32], index: 6, kind: input, shape index: {}]
  %s7 = inlined_call_operand.hbm [shape: f32[2,256,32], index: 7, kind: output, shape index: {}]
  %s8 = sld [smem:[#allocation0]]
  $region61: #{inverted_residual_forward.1} parent=0
    _
  %s10 = ssub.s32 1, %s8
  %s11 = scalar_select 0, %s10, %s8
  $region1: #{inverted_residual_forward.1} parent=0
    #allocation3 [shape = 'u8[262144]{0}', space=vmem, size = 0x40000, scoped, tag = 'output window, operand 0']
    #allocation4 [shape = 's32[2]{0}', space=sflag, size = 0x8, scoped, tag = 'scoped memory for inverted_residual_forward.1']
    %12 = vsyncpa [#allocation4], 0
    %s13 = scalar_lea.sflag [#allocation4], 1
    %14 = vsyncpa %s13, 0
    loop: start=0, step=1, limit=4
    $region2: #{inverted_residual_forward.1} parent=1 // loop_pre_header
      _
    $region3: #{inverted_residual_forward.1} parent=1 // loop_header
      %s16 = sphi 0, %s20
      %p17 = scmp.ge.s32.totalorder %s16, 4
      %s26 = sphi 0, %s28
      %s29 = sphi 0, %s26
      %s30 = sphi 0, %s29
      %s46 = sphi 0, %s30
      %s50 = sphi 0, %s50
      %s52 = sphi 0, %s50
      %s53 = sphi 0, %s52
      %s67 = sphi 0, %s53
      %s71 = sphi 0, %s71
      %s73 = sphi 0, %s71
      %s74 = sphi 0, %s73
      %s88 = sphi 0, %s74
      %s92 = sphi 0, %s92
      %s94 = sphi 0, %s92
      %s95 = sphi 0, %s94
      %s109 = sphi 0, %s95
      %s113 = sphi 0, %s113
      %s115 = sphi 0, %s113
      %s116 = sphi 0, %s115
      %s130 = sphi 0, %s116
      %s134 = sphi 0, %s134
      %s136 = sphi 0, %s134
      %s137 = sphi 0, %s136
      %s151 = sphi 0, %s137
      %s155 = sphi 0, %s155
      %s157 = sphi 0, %s155
      %s158 = sphi 0, %s157
      %s172 = sphi 0, %s158
      %s178 = sphi 0, %s180
      %s181 = sphi 0, %s178
      %s182 = sphi 0, %s181
      %s198 = sphi 0, %s182
    $region4: #{inverted_residual_forward.1} parent=1 // loop_header_branch
      %19 = sbr.rel (%p17) target = $region8
    $region5: #{inverted_residual_forward.1} parent=1 // loop_body
      %s21 = ssub.s32 %s16, 1
      %s22 = ssub.s32 %s16, 2
      %s23 = sadd.s32 %s16, 1
      %s24 = ssub.s32 %s16, %s23
      %p25 = scmp.eq.s32.totalorder %s24, 0
      %s27 = sadd.s32 %s26, 1
      %s28 = scalar_select %p25, %s26, %s27
      %p31 = pneg %p25
      %p32 = scmp.eq.s32.totalorder %s16, 1
      %p33 = por %p31, %p32
      %p34 = scmp.ne.s32.totalorder %s26, %s29
      %p35 = scmp.eq.s32.totalorder %s16, 0
      %p36 = por %p34, %p35
      %p37 = scmp.ne.s32.totalorder %s26, %s29
      %p38 = scmp.eq.s32.totalorder %s21, 1
      %p39 = por %p37, %p38
      %p40 = scmp.ne.s32.totalorder %s29, %s30
      %p41 = scmp.eq.s32.totalorder %s21, 0
      %p42 = por %p40, %p41
      %p43 = scmp.ne.s32.totalorder %s29, %s30
      %p44 = scmp.eq.s32.totalorder %s22, 1
      %p45 = por %p43, %p44
      %p47 = scmp.ne.s32.totalorder %s30, %s46
      %p48 = scmp.eq.s32.totalorder %s22, 0
      %p49 = por %p47, %p48
      %s51 = sadd.s32 %s50, 1
      %p54 = scmp.eq.s32.totalorder %s16, 1
      %p55 = scmp.ne.s32.totalorder %s50, %s52
      %p56 = scmp.eq.s32.totalorder %s16, 0
      %p57 = por %p55, %p56
      %p58 = scmp.ne.s32.totalorder %s50, %s52
      %p59 = scmp.eq.s32.totalorder %s21, 1
      %p60 = por %p58, %p59
      %p61 = scmp.ne.s32.totalorder %s52, %s53
      %p62 = scmp.eq.s32.totalorder %s21, 0
      %p63 = por %p61, %p62
      %p64 = scmp.ne.s32.totalorder %s52, %s53
      %p65 = scmp.eq.s32.totalorder %s22, 1
      %p66 = por %p64, %p65
      %p68 = scmp.ne.s32.totalorder %s53, %s67
      %p69 = scmp.eq.s32.totalorder %s22, 0
      %p70 = por %p68, %p69
      %s72 = sadd.s32 %s71, 1
      %p75 = scmp.eq.s32.totalorder %s16, 1
      %p76 = scmp.ne.s32.totalorder %s71, %s73
      %p77 = scmp.eq.s32.totalorder %s16, 0
      %p78 = por %p76, %p77
      %p79 = scmp.ne.s32.totalorder %s71, %s73
      %p80 = scmp.eq.s32.totalorder %s21, 1
      %p81 = por %p79, %p80
      %p82 = scmp.ne.s32.totalorder %s73, %s74
      %p83 = scmp.eq.s32.totalorder %s21, 0
      %p84 = por %p82, %p83
      %p85 = scmp.ne.s32.totalorder %s73, %s74
      %p86 = scmp.eq.s32.totalorder %s22, 1
      %p87 = por %p85, %p86
      %p89 = scmp.ne.s32.totalorder %s74, %s88
      %p90 = scmp.eq.s32.totalorder %s22, 0
      %p91 = por %p89, %p90
      %s93 = sadd.s32 %s92, 1
      %p96 = scmp.eq.s32.totalorder %s16, 1
      %p97 = scmp.ne.s32.totalorder %s92, %s94
      %p98 = scmp.eq.s32.totalorder %s16, 0
      %p99 = por %p97, %p98
      %p100 = scmp.ne.s32.totalorder %s92, %s94
      %p101 = scmp.eq.s32.totalorder %s21, 1
      %p102 = por %p100, %p101
      %p103 = scmp.ne.s32.totalorder %s94, %s95
      %p104 = scmp.eq.s32.totalorder %s21, 0
      %p105 = por %p103, %p104
      %p106 = scmp.ne.s32.totalorder %s94, %s95
      %p107 = scmp.eq.s32.totalorder %s22, 1
      %p108 = por %p106, %p107
      %p110 = scmp.ne.s32.totalorder %s95, %s109
      %p111 = scmp.eq.s32.totalorder %s22, 0
      %p112 = por %p110, %p111
      %s114 = sadd.s32 %s113, 1
      %p117 = scmp.eq.s32.totalorder %s16, 1
      %p118 = scmp.ne.s32.totalorder %s113, %s115
      %p119 = scmp.eq.s32.totalorder %s16, 0
      %p120 = por %p118, %p119
      %p121 = scmp.ne.s32.totalorder %s113, %s115
      %p122 = scmp.eq.s32.totalorder %s21, 1
      %p123 = por %p121, %p122
      %p124 = scmp.ne.s32.totalorder %s115, %s116
      %p125 = scmp.eq.s32.totalorder %s21, 0
      %p126 = por %p124, %p125
      %p127 = scmp.ne.s32.totalorder %s115, %s116
      %p128 = scmp.eq.s32.totalorder %s22, 1
      %p129 = por %p127, %p128
      %p131 = scmp.ne.s32.totalorder %s116, %s130
      %p132 = scmp.eq.s32.totalorder %s22, 0
      %p133 = por %p131, %p132
      %s135 = sadd.s32 %s134, 1
      %p138 = scmp.eq.s32.totalorder %s16, 1
      %p139 = scmp.ne.s32.totalorder %s134, %s136
      %p140 = scmp.eq.s32.totalorder %s16, 0
      %p141 = por %p139, %p140
      %p142 = scmp.ne.s32.totalorder %s134, %s136
      %p143 = scmp.eq.s32.totalorder %s21, 1
      %p144 = por %p142, %p143
      %p145 = scmp.ne.s32.totalorder %s136, %s137
      %p146 = scmp.eq.s32.totalorder %s21, 0
      %p147 = por %p145, %p146
      %p148 = scmp.ne.s32.totalorder %s136, %s137
      %p149 = scmp.eq.s32.totalorder %s22, 1
      %p150 = por %p148, %p149
      %p152 = scmp.ne.s32.totalorder %s137, %s151
      %p153 = scmp.eq.s32.totalorder %s22, 0
      %p154 = por %p152, %p153
      %s156 = sadd.s32 %s155, 1
      %p159 = scmp.eq.s32.totalorder %s16, 1
      %p160 = scmp.ne.s32.totalorder %s155, %s157
      %p161 = scmp.eq.s32.totalorder %s16, 0
      %p162 = por %p160, %p161
      %p163 = scmp.ne.s32.totalorder %s155, %s157
      %p164 = scmp.eq.s32.totalorder %s21, 1
      %p165 = por %p163, %p164
      %p166 = scmp.ne.s32.totalorder %s157, %s158
      %p167 = scmp.eq.s32.totalorder %s21, 0
      %p168 = por %p166, %p167
      %p169 = scmp.ne.s32.totalorder %s157, %s158
      %p170 = scmp.eq.s32.totalorder %s22, 1
      %p171 = por %p169, %p170
      %p173 = scmp.ne.s32.totalorder %s158, %s172
      %p174 = scmp.eq.s32.totalorder %s22, 0
      %p175 = por %p173, %p174
      %s176 = ssub.s32 %s16, %s23
      %p177 = scmp.eq.s32.totalorder %s176, 0
      %s179 = sadd.s32 %s178, 1
      %s180 = scalar_select %p177, %s178, %s179
      %p183 = pneg %p177
      %p184 = scmp.eq.s32.totalorder %s16, 1
      %p185 = por %p183, %p184
      %p186 = scmp.ne.s32.totalorder %s178, %s181
      %p187 = scmp.eq.s32.totalorder %s16, 0
      %p188 = por %p186, %p187
      %p189 = scmp.ne.s32.totalorder %s178, %s181
      %p190 = scmp.eq.s32.totalorder %s21, 1
      %p191 = por %p189, %p190
      %p192 = scmp.ne.s32.totalorder %s181, %s182
      %p193 = scmp.eq.s32.totalorder %s21, 0
      %p194 = por %p192, %p193
      %p195 = scmp.ne.s32.totalorder %s181, %s182
      %p196 = scmp.eq.s32.totalorder %s22, 1
      %p197 = por %p195, %p196
      %p199 = scmp.ne.s32.totalorder %s182, %s198
      %p200 = scmp.eq.s32.totalorder %s22, 0
      %p201 = por %p199, %p200
      %p202 = scmp.le.s32.totalorder 1, %s16
      %p203 = scmp.lt.s32.totalorder %s16, 3
      %p204 = pnand %p202, %p203
      %p205 = pneg %p204
      // Predicated region
      $region9: #{inverted_residual_forward.1} parent=5 // pred_check
        _
      $region10: #{inverted_residual_forward.1} parent=5 // pred_check_branch
        %207 = sbr.rel (%p204) target = $region12
      $region11: #{inverted_residual_forward.1} parent=5 // pred_region
        %s208 = ssub.s32 %s16, 1
        // Predicated region
        $region13: #{inverted_residual_forward.1} parent=11 // pred_check
          %p209 = pneg %p63
        $region14: #{inverted_residual_forward.1} parent=11 // pred_check_branch
          %211 = sbr.rel (%p209) target = $region16
        $region15: #{inverted_residual_forward.1} parent=11 // pred_region
          _
        $region16: #{inverted_residual_forward.1} parent=11 // pred_fallthru
          _
        // Predicated region
        $region17: #{inverted_residual_forward.1} parent=11 // pred_check
          %p212 = pneg %p84
        $region18: #{inverted_residual_forward.1} parent=11 // pred_check_branch
          %214 = sbr.rel (%p212) target = $region20
        $region19: #{inverted_residual_forward.1} parent=11 // pred_region
          _
        $region20: #{inverted_residual_forward.1} parent=11 // pred_fallthru
          _
        // Predicated region
        $region21: #{inverted_residual_forward.1} parent=11 // pred_check
          %p215 = pneg %p105
        $region22: #{inverted_residual_forward.1} parent=11 // pred_check_branch
          %217 = sbr.rel (%p215) target = $region24
        $region23: #{inverted_residual_forward.1} parent=11 // pred_region
          _
        $region24: #{inverted_residual_forward.1} parent=11 // pred_fallthru
          _
        // Predicated region
        $region25: #{inverted_residual_forward.1} parent=11 // pred_check
          %p218 = pneg %p126
        $region26: #{inverted_residual_forward.1} parent=11 // pred_check_branch
          %220 = sbr.rel (%p218) target = $region28
        $region27: #{inverted_residual_forward.1} parent=11 // pred_region
          _
        $region28: #{inverted_residual_forward.1} parent=11 // pred_fallthru
          _
        // Predicated region
        $region29: #{inverted_residual_forward.1} parent=11 // pred_check
          %p221 = pneg %p147
        $region30: #{inverted_residual_forward.1} parent=11 // pred_check_branch
          %223 = sbr.rel (%p221) target = $region32
        $region31: #{inverted_residual_forward.1} parent=11 // pred_region
          _
        $region32: #{inverted_residual_forward.1} parent=11 // pred_fallthru
          _
        // Predicated region
        $region33: #{inverted_residual_forward.1} parent=11 // pred_check
          %p224 = pneg %p168
        $region34: #{inverted_residual_forward.1} parent=11 // pred_check_branch
          %226 = sbr.rel (%p224) target = $region36
        $region35: #{inverted_residual_forward.1} parent=11 // pred_region
          _
        $region36: #{inverted_residual_forward.1} parent=11 // pred_fallthru
          _
      $region12: #{inverted_residual_forward.1} parent=5 // pred_fallthru
        _
      %p227 = scmp.lt.s32.totalorder %s16, 2
      // Predicated region
      $region37: #{inverted_residual_forward.1} parent=5 // pred_check
        %p228 = pneg %p227
      $region38: #{inverted_residual_forward.1} parent=5 // pred_check_branch
        %230 = sbr.rel (%p228) target = $region40
      $region39: #{inverted_residual_forward.1} parent=5 // pred_region
        // Predicated region
        $region41: #{inverted_residual_forward.1} parent=39 // pred_check
          %p231 = pneg %p36
        $region42: #{inverted_residual_forward.1} parent=39 // pred_check_branch
          %233 = sbr.rel (%p231) target = $region44
        $region43: #{inverted_residual_forward.1} parent=39 // pred_region
          %p234 = scmp.lt.s32.totalorder %s16, 1
          %s235 = scalar_select %p234, %s16, 1
          %s236 = smul.addr %s235, 32
          %s237 = smul.addr %s236, 8
          %s238 = scalar_lea.vmem %s0, %s237
        $region44: #{inverted_residual_forward.1} parent=39 // pred_fallthru
          _
      $region40: #{inverted_residual_forward.1} parent=5 // pred_fallthru
        _
      %p239 = scmp.le.s32.totalorder 1, %s16
      %p240 = scmp.lt.s32.totalorder %s16, 3
      %p241 = pnand %p239, %p240
      %p242 = pneg %p241
      // Predicated region
      $region45: #{inverted_residual_forward.1} parent=5 // pred_check
        _
      $region46: #{inverted_residual_forward.1} parent=5 // pred_check_branch
        %244 = sbr.rel (%p241) target = $region48
      $region47: #{inverted_residual_forward.1} parent=5 // pred_region
        %s245 = ssub.s32 %s16, 1
        %p246 = scmp.lt.s32.totalorder %s21, 1
        %s247 = scalar_select %p246, %s21, 1
        %s248 = smul.addr %s247, 32
        %s249 = smul.addr %s248, 8
        %s250 = scalar_lea.vmem %s0, %s249
        %p251 = pneg %p42
        %p252 = pneg %p39
        %p253 = pneg %p63
        %p254 = pneg %p60
        %p255 = pneg %p84
        %p256 = pneg %p81
        %p257 = pneg %p105
        %p258 = pneg %p102
        %p259 = pneg %p126
        %p260 = pneg %p123
        %p261 = pneg %p147
        %p262 = pneg %p144
        %p263 = pneg %p168
        %p264 = pneg %p165
        %p265 = pneg %p194
        %p266 = pneg %p191
        %s267 = sand.u32 %s181, 1
        %s268 = scalar_lea.sflag [#allocation4], %s267
        %s269 = sand.u32 %s181, 1
        %s270 = smul.addr %s269, 256
        %s271 = scalar_lea.vmem [#allocation3], %s270
        %p272 = scmp.lt.s32.totalorder %s21, 1
        %s273 = scalar_select %p272, %s21, 1
        %s274 = smul.addr %s273, 32
        %s275 = smul.addr %s274, 8
        %s276 = scalar_lea.vmem %s0, %s275
        %v277 = vld [vmem:[%s276] sm:$0xff]
        %v278 = vld [vmem:[%s276 + $0x8] sm:$0xff]
        %v279 = vld [vmem:[%s276 + $0x10] sm:$0xff]
        %v280 = vld [vmem:[%s276 + $0x18] sm:$0xff]
        %v281 = vld [vmem:[%s276 + $0x20] sm:$0xff]
        %v282 = vld [vmem:[%s276 + $0x28] sm:$0xff]
        %v283 = vld [vmem:[%s276 + $0x30] sm:$0xff]
        %v284 = vld [vmem:[%s276 + $0x38] sm:$0xff]
        %v285 = vld [vmem:[%s276 + $0x40] sm:$0xff]
        %v286 = vld [vmem:[%s276 + $0x48] sm:$0xff]
        %v287 = vld [vmem:[%s276 + $0x50] sm:$0xff]
        %v288 = vld [vmem:[%s276 + $0x58] sm:$0xff]
        %v289 = vld [vmem:[%s276 + $0x60] sm:$0xff]
        %v290 = vld [vmem:[%s276 + $0x68] sm:$0xff]
        %v291 = vld [vmem:[%s276 + $0x70] sm:$0xff]
        %v292 = vld [vmem:[%s276 + $0x78] sm:$0xff]
        %v293 = vld [vmem:[%s276 + $0x80] sm:$0xff]
        %v294 = vld [vmem:[%s276 + $0x88] sm:$0xff]
        %v295 = vld [vmem:[%s276 + $0x90] sm:$0xff]
        %v296 = vld [vmem:[%s276 + $0x98] sm:$0xff]
        %v297 = vld [vmem:[%s276 + $0xa0] sm:$0xff]
        %v298 = vld [vmem:[%s276 + $0xa8] sm:$0xff]
        %v299 = vld [vmem:[%s276 + $0xb0] sm:$0xff]
        %v300 = vld [vmem:[%s276 + $0xb8] sm:$0xff]
        %v301 = vld [vmem:[%s276 + $0xc0] sm:$0xff]
        %v302 = vld [vmem:[%s276 + $0xc8] sm:$0xff]
        %v303 = vld [vmem:[%s276 + $0xd0] sm:$0xff]
        %v304 = vld [vmem:[%s276 + $0xd8] sm:$0xff]
        %v305 = vld [vmem:[%s276 + $0xe0] sm:$0xff]
        %v306 = vld [vmem:[%s276 + $0xe8] sm:$0xff]
        %v307 = vld [vmem:[%s276 + $0xf0] sm:$0xff]
        %v308 = vld [vmem:[%s276 + $0xf8] sm:$0xff]
        %v309 = vld [vmem:[%s1] sm:$0xff]
        %v310 = vld [vmem:[%s1 + $0x8] sm:$0xff]
        %v311 = vld [vmem:[%s1 + $0x10] sm:$0xff]
        %v312 = vld [vmem:[%s1 + $0x18] sm:$0xff]
        %v313 = vld [vmem:[%s2] sm:$0x1]
        %v315 = vlaneseq
        %v316 = vshrl.u32 %v315, 7
        %v317 = vsub.s32 0, %v316
        %v318 = vrot.slane %v313, %v317
        %vm320 = vcmask 261120
        %v322 = vsel %vm320, %v277, 0
        %v325 = vsel %vm320, %v278, 0
        %v328 = vsel %vm320, %v279, 0
        %v331 = vsel %vm320, %v280, 0
        %v334 = vsel %vm320, %v281, 0
        %v337 = vsel %vm320, %v282, 0
        %v340 = vsel %vm320, %v283, 0
        %v343 = vsel %vm320, %v284, 0
        %v346 = vsel %vm320, %v285, 0
        %v349 = vsel %vm320, %v286, 0
        %v352 = vsel %vm320, %v287, 0
        %v355 = vsel %vm320, %v288, 0
        %v358 = vsel %vm320, %v289, 0
        %v361 = vsel %vm320, %v290, 0
        %v364 = vsel %vm320, %v291, 0
        %v367 = vsel %vm320, %v292, 0
        %v370 = vsel %vm320, %v293, 0
        %v373 = vsel %vm320, %v294, 0
        %v376 = vsel %vm320, %v295, 0
        %v379 = vsel %vm320, %v296, 0
        %v382 = vsel %vm320, %v297, 0
        %v385 = vsel %vm320, %v298, 0
        %v388 = vsel %vm320, %v299, 0
        %v391 = vsel %vm320, %v300, 0
        %v394 = vsel %vm320, %v301, 0
        %v397 = vsel %vm320, %v302, 0
        %v400 = vsel %vm320, %v303, 0
        %v403 = vsel %vm320, %v304, 0
        %v406 = vsel %vm320, %v305, 0
        %v409 = vsel %vm320, %v306, 0
        %v412 = vsel %vm320, %v307, 0
        %v415 = vsel %vm320, %v308, 0
        %417 = vmatprep.subr.mxu0 0.0
        %418 = vmatpush1.msra.mxu0 0.0
        %419 = vmatprep.subr.mxu0 0.0
        %420 = vmatpush1.msra.mxu0 0.0
        %421 = vmatprep.subr.mxu0 0.0
        %422 = vmatpush1.msra.mxu0 0.0
        %423 = vmatprep.subr.mxu0 0.0
        %424 = vmatpush1.msra.mxu0 0.0
        %425 = vmatprep.subr.mxu0 0.0
        %426 = vmatpush1.msra.mxu0 0.0
        %427 = vmatprep.subr.mxu0 0.0
        %428 = vmatpush1.msra.mxu0 0.0
        %429 = vmatprep.subr.mxu0 0.0
        %430 = vmatpush1.msra.mxu0 0.0
        %431 = vmatprep.subr.mxu0 0.0
        %432 = vmatpush1.msra.mxu0 0.0
        %433 = vmatprep.subr.mxu0 0.0
        %434 = vmatpush1.msra.mxu0 0.0
        %435 = vmatprep.subr.mxu0 0.0
        %436 = vmatpush1.msra.mxu0 0.0
        %437 = vmatprep.subr.mxu0 0.0
        %438 = vmatpush1.msra.mxu0 0.0
        %439 = vmatprep.subr.mxu0 0.0
        %440 = vmatpush1.msra.mxu0 0.0
        %441 = vmatprep.subr.mxu0 0.0
        %442 = vmatpush1.msra.mxu0 %v312
        %443 = vmatprep.subr.mxu0 0.0
        %444 = vmatpush1.msra.mxu0 %v311
        %445 = vmatprep.subr.mxu0 0.0
        %446 = vmatpush1.msra.mxu0 %v310
        %447 = vmatprep.subr.mxu0 0.0
        %448 = vmatpush1.msra.mxu0 %v309
        %449 = vmatprep.subr.mxu0 0.0
        %450 = vmatpush2.msra.mxu0 0.0
        %451 = vmatprep.subr.mxu0 0.0
        %452 = vmatpush2.msra.mxu0 0.0
        %453 = vmatprep.subr.mxu0 0.0
        %454 = vmatpush2.msra.mxu0 0.0
        %455 = vmatprep.subr.mxu0 0.0
        %456 = vmatpush2.msra.mxu0 0.0
        %457 = vmatprep.subr.mxu0 0.0
        %458 = vmatpush2.msra.mxu0 0.0
        %459 = vmatprep.subr.mxu0 0.0
        %460 = vmatpush2.msra.mxu0 0.0
        %461 = vmatprep.subr.mxu0 0.0
        %462 = vmatpush2.msra.mxu0 0.0
        %463 = vmatprep.subr.mxu0 0.0
        %464 = vmatpush2.msra.mxu0 0.0
        %465 = vmatprep.subr.mxu0 0.0
        %466 = vmatpush2.msra.mxu0 0.0
        %467 = vmatprep.subr.mxu0 0.0
        %468 = vmatpush2.msra.mxu0 0.0
        %469 = vmatprep.subr.mxu0 0.0
        %470 = vmatpush2.msra.mxu0 0.0
        %471 = vmatprep.subr.mxu0 0.0
        %472 = vmatpush2.msra.mxu0 0.0
        %473 = vmatprep.subr.mxu0 0.0
        %474 = vmatpush2.msra.mxu0 0.0
        %475 = vmatprep.subr.mxu0 0.0
        %476 = vmatpush2.msra.mxu0 0.0
        %477 = vmatprep.subr.mxu0 0.0
        %478 = vmatpush2.msra.mxu0 0.0
        %479 = vmatprep.subr.mxu0 0.0
        %480 = vmatpush2.msra.mxu0 0.0
        %481 = vmatprep.mubr.f32.mxu0 0.0
        %482 = vmatmul.mubr.f32.gmra.mxu0 %v322
        %v483 = vpop.f32.mrf.mxu0
        %v484 = vadd.f32 %v318, %v483
        %v485 = vpop.f32.mrf.mxu0
        %486 = vmatprep.mubr.f32.mxu0 0.0
        %487 = vmatmul.mubr.f32.gmra.mxu0 %v325
        %v488 = vpop.f32.mrf.mxu0
        %v489 = vadd.f32 %v318, %v488
        %v490 = vpop.f32.mrf.mxu0
        %491 = vmatprep.mubr.f32.mxu0 0.0
        %492 = vmatmul.mubr.f32.gmra.mxu0 %v328
        %v493 = vpop.f32.mrf.mxu0
        %v494 = vadd.f32 %v318, %v493
        %v495 = vpop.f32.mrf.mxu0
        %496 = vmatprep.mubr.f32.mxu0 0.0
        %497 = vmatmul.mubr.f32.gmra.mxu0 %v331
        %v498 = vpop.f32.mrf.mxu0
        %v499 = vadd.f32 %v318, %v498
        %v500 = vpop.f32.mrf.mxu0
        %501 = vmatprep.mubr.f32.mxu0 0.0
        %502 = vmatmul.mubr.f32.gmra.mxu0 %v334
        %v503 = vpop.f32.mrf.mxu0
        %v504 = vadd.f32 %v318, %v503
        %v505 = vpop.f32.mrf.mxu0
        %506 = vmatprep.mubr.f32.mxu0 0.0
        %507 = vmatmul.mubr.f32.gmra.mxu0 %v337
        %v508 = vpop.f32.mrf.mxu0
        %v509 = vadd.f32 %v318, %v508
        %v510 = vpop.f32.mrf.mxu0
        %511 = vmatprep.mubr.f32.mxu0 0.0
        %512 = vmatmul.mubr.f32.gmra.mxu0 %v340
        %v513 = vpop.f32.mrf.mxu0
        %v514 = vadd.f32 %v318, %v513
        %v515 = vpop.f32.mrf.mxu0
        %516 = vmatprep.mubr.f32.mxu0 0.0
        %517 = vmatmul.mubr.f32.gmra.mxu0 %v343
        %v518 = vpop.f32.mrf.mxu0
        %v519 = vadd.f32 %v318, %v518
        %v520 = vpop.f32.mrf.mxu0
        %521 = vmatprep.mubr.f32.mxu0 0.0
        %522 = vmatmul.mubr.f32.gmra.mxu0 %v346
        %v523 = vpop.f32.mrf.mxu0
        %v524 = vadd.f32 %v318, %v523
        %v525 = vpop.f32.mrf.mxu0
        %526 = vmatprep.mubr.f32.mxu0 0.0
        %527 = vmatmul.mubr.f32.gmra.mxu0 %v349
        %v528 = vpop.f32.mrf.mxu0
        %v529 = vadd.f32 %v318, %v528
        %v530 = vpop.f32.mrf.mxu0
        %531 = vmatprep.mubr.f32.mxu0 0.0
        %532 = vmatmul.mubr.f32.gmra.mxu0 %v352
        %v533 = vpop.f32.mrf.mxu0
        %v534 = vadd.f32 %v318, %v533
        %v535 = vpop.f32.mrf.mxu0
        %536 = vmatprep.mubr.f32.mxu0 0.0
        %537 = vmatmul.mubr.f32.gmra.mxu0 %v355
        %v538 = vpop.f32.mrf.mxu0
        %v539 = vadd.f32 %v318, %v538
        %v540 = vpop.f32.mrf.mxu0
        %541 = vmatprep.mubr.f32.mxu0 0.0
        %542 = vmatmul.mubr.f32.gmra.mxu0 %v358
        %v543 = vpop.f32.mrf.mxu0
        %v544 = vadd.f32 %v318, %v543
        %v545 = vpop.f32.mrf.mxu0
        %546 = vmatprep.mubr.f32.mxu0 0.0
        %547 = vmatmul.mubr.f32.gmra.mxu0 %v361
        %v548 = vpop.f32.mrf.mxu0
        %v549 = vadd.f32 %v318, %v548
        %v550 = vpop.f32.mrf.mxu0
        %551 = vmatprep.mubr.f32.mxu0 0.0
        %552 = vmatmul.mubr.f32.gmra.mxu0 %v364
        %v553 = vpop.f32.mrf.mxu0
        %v554 = vadd.f32 %v318, %v553
        %v555 = vpop.f32.mrf.mxu0
        %556 = vmatprep.mubr.f32.mxu0 0.0
        %557 = vmatmul.mubr.f32.gmra.mxu0 %v367
        %v558 = vpop.f32.mrf.mxu0
        %v559 = vadd.f32 %v318, %v558
        %v560 = vpop.f32.mrf.mxu0
        %561 = vmatprep.mubr.f32.mxu0 0.0
        %562 = vmatmul.mubr.f32.gmra.mxu0 %v370
        %v563 = vpop.f32.mrf.mxu0
        %v564 = vadd.f32 %v318, %v563
        %v565 = vpop.f32.mrf.mxu0
        %566 = vmatprep.mubr.f32.mxu0 0.0
        %567 = vmatmul.mubr.f32.gmra.mxu0 %v373
        %v568 = vpop.f32.mrf.mxu0
        %v569 = vadd.f32 %v318, %v568
        %v570 = vpop.f32.mrf.mxu0
        %571 = vmatprep.mubr.f32.mxu0 0.0
        %572 = vmatmul.mubr.f32.gmra.mxu0 %v376
        %v573 = vpop.f32.mrf.mxu0
        %v574 = vadd.f32 %v318, %v573
        %v575 = vpop.f32.mrf.mxu0
        %576 = vmatprep.mubr.f32.mxu0 0.0
        %577 = vmatmul.mubr.f32.gmra.mxu0 %v379
        %v578 = vpop.f32.mrf.mxu0
        %v579 = vadd.f32 %v318, %v578
        %v580 = vpop.f32.mrf.mxu0
        %581 = vmatprep.mubr.f32.mxu0 0.0
        %582 = vmatmul.mubr.f32.gmra.mxu0 %v382
        %v583 = vpop.f32.mrf.mxu0
        %v584 = vadd.f32 %v318, %v583
        %v585 = vpop.f32.mrf.mxu0
        %586 = vmatprep.mubr.f32.mxu0 0.0
        %587 = vmatmul.mubr.f32.gmra.mxu0 %v385
        %v588 = vpop.f32.mrf.mxu0
        %v589 = vadd.f32 %v318, %v588
        %v590 = vpop.f32.mrf.mxu0
        %591 = vmatprep.mubr.f32.mxu0 0.0
        %592 = vmatmul.mubr.f32.gmra.mxu0 %v388
        %v593 = vpop.f32.mrf.mxu0
        %v594 = vadd.f32 %v318, %v593
        %v595 = vpop.f32.mrf.mxu0
        %596 = vmatprep.mubr.f32.mxu0 0.0
        %597 = vmatmul.mubr.f32.gmra.mxu0 %v391
        %v598 = vpop.f32.mrf.mxu0
        %v599 = vadd.f32 %v318, %v598
        %v600 = vpop.f32.mrf.mxu0
        %601 = vmatprep.mubr.f32.mxu0 0.0
        %602 = vmatmul.mubr.f32.gmra.mxu0 %v394
        %v603 = vpop.f32.mrf.mxu0
        %v604 = vadd.f32 %v318, %v603
        %v605 = vpop.f32.mrf.mxu0
        %606 = vmatprep.mubr.f32.mxu0 0.0
        %607 = vmatmul.mubr.f32.gmra.mxu0 %v397
        %v608 = vpop.f32.mrf.mxu0
        %v609 = vadd.f32 %v318, %v608
        %v610 = vpop.f32.mrf.mxu0
        %611 = vmatprep.mubr.f32.mxu0 0.0
        %612 = vmatmul.mubr.f32.gmra.mxu0 %v400
        %v613 = vpop.f32.mrf.mxu0
        %v614 = vadd.f32 %v318, %v613
        %v615 = vpop.f32.mrf.mxu0
        %616 = vmatprep.mubr.f32.mxu0 0.0
        %617 = vmatmul.mubr.f32.gmra.mxu0 %v403
        %v618 = vpop.f32.mrf.mxu0
        %v619 = vadd.f32 %v318, %v618
        %v620 = vpop.f32.mrf.mxu0
        %621 = vmatprep.mubr.f32.mxu0 0.0
        %622 = vmatmul.mubr.f32.gmra.mxu0 %v406
        %v623 = vpop.f32.mrf.mxu0
        %v624 = vadd.f32 %v318, %v623
        %v625 = vpop.f32.mrf.mxu0
        %626 = vmatprep.mubr.f32.mxu0 0.0
        %627 = vmatmul.mubr.f32.gmra.mxu0 %v409
        %v628 = vpop.f32.mrf.mxu0
        %v629 = vadd.f32 %v318, %v628
        %v630 = vpop.f32.mrf.mxu0
        %631 = vmatprep.mubr.f32.mxu0 0.0
        %632 = vmatmul.mubr.f32.gmra.mxu0 %v412
        %v633 = vpop.f32.mrf.mxu0
        %v634 = vadd.f32 %v318, %v633
        %v635 = vpop.f32.mrf.mxu0
        %636 = vmatprep.mubr.f32.mxu0 0.0
        %637 = vmatmul.mubr.f32.gmra.mxu0 %v415
        %v638 = vpop.f32.mrf.mxu0
        %v639 = vadd.f32 %v318, %v638
        %v640 = vpop.f32.mrf.mxu0
        %641 = vdwg.mxu0
        %v642 = vmax.f32 %v484, 0.0
        %v643 = vmax.f32 %v489, 0.0
        %v644 = vmax.f32 %v494, 0.0
        %v645 = vmax.f32 %v499, 0.0
        %v646 = vmax.f32 %v504, 0.0
        %v647 = vmax.f32 %v509, 0.0
        %v648 = vmax.f32 %v514, 0.0
        %v649 = vmax.f32 %v519, 0.0
        %v650 = vmax.f32 %v524, 0.0
        %v651 = vmax.f32 %v529, 0.0
        %v652 = vmax.f32 %v534, 0.0
        %v653 = vmax.f32 %v539, 0.0
        %v654 = vmax.f32 %v544, 0.0
        %v655 = vmax.f32 %v549, 0.0
        %v656 = vmax.f32 %v554, 0.0
        %v657 = vmax.f32 %v559, 0.0
        %v658 = vmax.f32 %v564, 0.0
        %v659 = vmax.f32 %v569, 0.0
        %v660 = vmax.f32 %v574, 0.0
        %v661 = vmax.f32 %v579, 0.0
        %v662 = vmax.f32 %v584, 0.0
        %v663 = vmax.f32 %v589, 0.0
        %v664 = vmax.f32 %v594, 0.0
        %v665 = vmax.f32 %v599, 0.0
        %v666 = vmax.f32 %v604, 0.0
        %v667 = vmax.f32 %v609, 0.0
        %v668 = vmax.f32 %v614, 0.0
        %v669 = vmax.f32 %v619, 0.0
        %v670 = vmax.f32 %v624, 0.0
        %v671 = vmax.f32 %v629, 0.0
        %v672 = vmax.f32 %v634, 0.0
        %v673 = vmax.f32 %v639, 0.0
        %v674 = vmin.f32 %v642, 6.0
        %v675 = vmin.f32 %v643, 6.0
        %v676 = vmin.f32 %v644, 6.0
        %v677 = vmin.f32 %v645, 6.0
        %v678 = vmin.f32 %v646, 6.0
        %v679 = vmin.f32 %v647, 6.0
        %v680 = vmin.f32 %v648, 6.0
        %v681 = vmin.f32 %v649, 6.0
        %v682 = vmin.f32 %v650, 6.0
        %v683 = vmin.f32 %v651, 6.0
        %v684 = vmin.f32 %v652, 6.0
        %v685 = vmin.f32 %v653, 6.0
        %v686 = vmin.f32 %v654, 6.0
        %v687 = vmin.f32 %v655, 6.0
        %v688 = vmin.f32 %v656, 6.0
        %v689 = vmin.f32 %v657, 6.0
        %v690 = vmin.f32 %v658, 6.0
        %v691 = vmin.f32 %v659, 6.0
        %v692 = vmin.f32 %v660, 6.0
        %v693 = vmin.f32 %v661, 6.0
        %v694 = vmin.f32 %v662, 6.0
        %v695 = vmin.f32 %v663, 6.0
        %v696 = vmin.f32 %v664, 6.0
        %v697 = vmin.f32 %v665, 6.0
        %v698 = vmin.f32 %v666, 6.0
        %v699 = vmin.f32 %v667, 6.0
        %v700 = vmin.f32 %v668, 6.0
        %v701 = vmin.f32 %v669, 6.0
        %v702 = vmin.f32 %v670, 6.0
        %v703 = vmin.f32 %v671, 6.0
        %v704 = vmin.f32 %v672, 6.0
        %v705 = vmin.f32 %v673, 6.0
        %706 = vst [vmem:[#allocation2] sm:$0xff] 0.0
        %707 = vst [vmem:[#allocation2 + $0x8] sm:$0xff] 0.0
        %708 = vst [vmem:[#allocation2 + $0x10] sm:$0x3] 0.0
        %709 = vst [vmem:[#allocation2 + $0x18] sm:$0xff] 0.0
        %710 = vst [vmem:[#allocation2 + $0x20] sm:$0xff] 0.0
        %711 = vst [vmem:[#allocation2 + $0x28] sm:$0x3] 0.0
        %712 = vst [vmem:[#allocation2 + $0x30] sm:$0xff] 0.0
        %713 = vst [vmem:[#allocation2 + $0x38] sm:$0xff] 0.0
        %714 = vst [vmem:[#allocation2 + $0x40] sm:$0x3] 0.0
        %715 = vst [vmem:[#allocation2 + $0x48] sm:$0xff] 0.0
        %716 = vst [vmem:[#allocation2 + $0x50] sm:$0xff] 0.0
        %717 = vst [vmem:[#allocation2 + $0x58] sm:$0x3] 0.0
        %718 = vst [vmem:[#allocation2 + $0x60] sm:$0xff] 0.0
        %719 = vst [vmem:[#allocation2 + $0x68] sm:$0xff] 0.0
        %720 = vst [vmem:[#allocation2 + $0x70] sm:$0x3] 0.0
        %721 = vst [vmem:[#allocation2 + $0x78] sm:$0xff] 0.0
        %722 = vst [vmem:[#allocation2 + $0x80] sm:$0xff] 0.0
        %723 = vst [vmem:[#allocation2 + $0x88] sm:$0x3] 0.0
        %724 = vst [vmem:[#allocation2 + $0x90] sm:$0xff] 0.0
        %725 = vst [vmem:[#allocation2 + $0x98] sm:$0xff] 0.0
        %726 = vst [vmem:[#allocation2 + $0xa0] sm:$0x3] 0.0
        %727 = vst [vmem:[#allocation2 + $0xa8] sm:$0xff] 0.0
        %728 = vst [vmem:[#allocation2 + $0xb0] sm:$0xff] 0.0
        %729 = vst [vmem:[#allocation2 + $0xb8] sm:$0x3] 0.0
        %730 = vst [vmem:[#allocation2 + $0xc0] sm:$0xff] 0.0
        %731 = vst [vmem:[#allocation2 + $0xc8] sm:$0xff] 0.0
        %732 = vst [vmem:[#allocation2 + $0xd0] sm:$0x3] 0.0
        %733 = vst [vmem:[#allocation2 + $0xd8] sm:$0xff] 0.0
        %734 = vst [vmem:[#allocation2 + $0xe0] sm:$0xff] 0.0
        %735 = vst [vmem:[#allocation2 + $0xe8] sm:$0x3] 0.0
        %736 = vst [vmem:[#allocation2 + $0xf0] sm:$0xff] 0.0
        %737 = vst [vmem:[#allocation2 + $0xf8] sm:$0xff] 0.0
        %738 = vst [vmem:[#allocation2 + $0x100] sm:$0x3] 0.0
        %739 = vst [vmem:[#allocation2 + $0x108] sm:$0xff] 0.0
        %740 = vst [vmem:[#allocation2 + $0x110] sm:$0xff] 0.0
        %741 = vst [vmem:[#allocation2 + $0x118] sm:$0x3] 0.0
        %742 = vst [vmem:[#allocation2 + $0x120] sm:$0xff] 0.0
        %743 = vst [vmem:[#allocation2 + $0x128] sm:$0xff] 0.0
        %744 = vst [vmem:[#allocation2 + $0x130] sm:$0x3] 0.0
        %745 = vst [vmem:[#allocation2 + $0x138] sm:$0xff] 0.0
        %746 = vst [vmem:[#allocation2 + $0x140] sm:$0xff] 0.0
        %747 = vst [vmem:[#allocation2 + $0x148] sm:$0x3] 0.0
        %748 = vst [vmem:[#allocation2 + $0x150] sm:$0xff] 0.0
        %749 = vst [vmem:[#allocation2 + $0x158] sm:$0xff] 0.0
        %750 = vst [vmem:[#allocation2 + $0x160] sm:$0x3] 0.0
        %751 = vst [vmem:[#allocation2 + $0x168] sm:$0xff] 0.0
        %752 = vst [vmem:[#allocation2 + $0x170] sm:$0xff] 0.0
        %753 = vst [vmem:[#allocation2 + $0x178] sm:$0x3] 0.0
        %754 = vst [vmem:[#allocation2 + $0x180] sm:$0xff] 0.0
        %755 = vst [vmem:[#allocation2 + $0x188] sm:$0xff] 0.0
        %756 = vst [vmem:[#allocation2 + $0x190] sm:$0x3] 0.0
        %757 = vst [vmem:[#allocation2 + $0x198] sm:$0xff] 0.0
        %758 = vst [vmem:[#allocation2 + $0x1a0] sm:$0xff] 0.0
        %759 = vst [vmem:[#allocation2 + $0x1a8] sm:$0x3] 0.0
        %s760 = scalar_lea.vmem [#allocation2], 24
        %761 = vst [vmem:[%s760 + $0x1] sm:$0xff] %v674
        %762 = vst [vmem:[%s760 + $0x9] sm:$0xff] %v675
        %763 = vst [vmem:[%s760 + $0x19] sm:$0xff] %v676
        %764 = vst [vmem:[%s760 + $0x21] sm:$0xff] %v677
        %765 = vst [vmem:[%s760 + $0x31] sm:$0xff] %v678
        %766 = vst [vmem:[%s760 + $0x39] sm:$0xff] %v679
        %767 = vst [vmem:[%s760 + $0x49] sm:$0xff] %v680
        %768 = vst [vmem:[%s760 + $0x51] sm:$0xff] %v681
        %769 = vst [vmem:[%s760 + $0x61] sm:$0xff] %v682
        %770 = vst [vmem:[%s760 + $0x69] sm:$0xff] %v683
        %771 = vst [vmem:[%s760 + $0x79] sm:$0xff] %v684
        %772 = vst [vmem:[%s760 + $0x81] sm:$0xff] %v685
        %773 = vst [vmem:[%s760 + $0x91] sm:$0xff] %v686
        %774 = vst [vmem:[%s760 + $0x99] sm:$0xff] %v687
        %775 = vst [vmem:[%s760 + $0xa9] sm:$0xff] %v688
        %776 = vst [vmem:[%s760 + $0xb1] sm:$0xff] %v689
        %777 = vst [vmem:[%s760 + $0xc1] sm:$0xff] %v690
        %778 = vst [vmem:[%s760 + $0xc9] sm:$0xff] %v691
        %779 = vst [vmem:[%s760 + $0xd9] sm:$0xff] %v692
        %780 = vst [vmem:[%s760 + $0xe1] sm:$0xff] %v693
        %781 = vst [vmem:[%s760 + $0xf1] sm:$0xff] %v694
        %782 = vst [vmem:[%s760 + $0xf9] sm:$0xff] %v695
        %783 = vst [vmem:[%s760 + $0x109] sm:$0xff] %v696
        %784 = vst [vmem:[%s760 + $0x111] sm:$0xff] %v697
        %785 = vst [vmem:[%s760 + $0x121] sm:$0xff] %v698
        %786 = vst [vmem:[%s760 + $0x129] sm:$0xff] %v699
        %787 = vst [vmem:[%s760 + $0x139] sm:$0xff] %v700
        %788 = vst [vmem:[%s760 + $0x141] sm:$0xff] %v701
        %789 = vst [vmem:[%s760 + $0x151] sm:$0xff] %v702
        %790 = vst [vmem:[%s760 + $0x159] sm:$0xff] %v703
        %791 = vst [vmem:[%s760 + $0x169] sm:$0xff] %v704
        %792 = vst [vmem:[%s760 + $0x171] sm:$0xff] %v705
        %v793 = vld [vmem:[%s3] sm:$0xff]
        %v794 = vld [vmem:[%s3 + $0x8] sm:$0x1]
        %v795 = vld [vmem:[%s4] sm:$0x1]
        %v796 = vld [vmem:[%s5] sm:$0xff]
        %v797 = vld [vmem:[%s5 + $0x8] sm:$0xff]
        %v798 = vld [vmem:[%s5 + $0x10] sm:$0xff]
        %v799 = vld [vmem:[%s5 + $0x18] sm:$0xff]
        %v800 = vld [vmem:[%s5 + $0x20] sm:$0xff]
        %v801 = vld [vmem:[%s5 + $0x28] sm:$0xff]
        %v802 = vld [vmem:[%s5 + $0x30] sm:$0xff]
        %v803 = vld [vmem:[%s5 + $0x38] sm:$0xff]
        %v804 = vld [vmem:[%s5 + $0x40] sm:$0xff]
        %v805 = vld [vmem:[%s5 + $0x48] sm:$0xff]
        %v806 = vld [vmem:[%s5 + $0x50] sm:$0xff]
        %v807 = vld [vmem:[%s5 + $0x58] sm:$0xff]
        %v808 = vld [vmem:[%s5 + $0x60] sm:$0xff]
        %v809 = vld [vmem:[%s5 + $0x68] sm:$0xff]
        %v810 = vld [vmem:[%s5 + $0x70] sm:$0xff]
        %v811 = vld [vmem:[%s5 + $0x78] sm:$0xff]
        %v812 = vld [vmem:[%s6] sm:$0x1]
        %v813 = vld [vmem:[#allocation2] sm:$0xff]
        %v814 = vld [vmem:[#allocation2 + $0x8] sm:$0xff]
        %v815 = vld [vmem:[#allocation2 + $0x18] sm:$0xff]
        %v816 = vld [vmem:[#allocation2 + $0x20] sm:$0xff]
        %v817 = vld [vmem:[#allocation2 + $0x30] sm:$0xff]
        %v818 = vld [vmem:[#allocation2 + $0x38] sm:$0xff]
        %v819 = vld [vmem:[#allocation2 + $0x48] sm:$0xff]
        %v820 = vld [vmem:[#allocation2 + $0x50] sm:$0xff]
        %v821 = vld [vmem:[#allocation2 + $0x60] sm:$0xff]
        %v822 = vld [vmem:[#allocation2 + $0x68] sm:$0xff]
        %v823 = vld [vmem:[#allocation2 + $0x78] sm:$0xff]
        %v824 = vld [vmem:[#allocation2 + $0x80] sm:$0xff]
        %v825 = vld [vmem:[#allocation2 + $0x90] sm:$0xff]
        %v826 = vld [vmem:[#allocation2 + $0x98] sm:$0xff]
        %v827 = vld [vmem:[#allocation2 + $0xa8] sm:$0xff]
        %v828 = vld [vmem:[#allocation2 + $0xb0] sm:$0xff]
        %v829 = vlaneseq
        %v830 = vshrl.u32 %v829, 7
        %v831 = vsub.s32 0, %v830
        %v832 = vrot.slane %v793, %v831
        %v833 = vmul.f32 %v813, %v832
        %v834 = vmul.f32 %v814, %v832
        %v835 = vmul.f32 %v815, %v832
        %v836 = vmul.f32 %v816, %v832
        %v837 = vmul.f32 %v817, %v832
        %v838 = vmul.f32 %v818, %v832
        %v839 = vmul.f32 %v819, %v832
        %v840 = vmul.f32 %v820, %v832
        %v841 = vmul.f32 %v821, %v832
        %v842 = vmul.f32 %v822, %v832
        %v843 = vmul.f32 %v823, %v832
        %v844 = vmul.f32 %v824, %v832
        %v845 = vmul.f32 %v825, %v832
        %v846 = vmul.f32 %v826, %v832
        %v847 = vmul.f32 %v827, %v832
        %v848 = vmul.f32 %v828, %v832
        %v849 = vadd.f32 %v833, 0.0
        %v850 = vadd.f32 %v834, 0.0
        %v851 = vadd.f32 %v835, 0.0
        %v852 = vadd.f32 %v836, 0.0
        %v853 = vadd.f32 %v837, 0.0
        %v854 = vadd.f32 %v838, 0.0
        %v855 = vadd.f32 %v839, 0.0
        %v856 = vadd.f32 %v840, 0.0
        %v857 = vadd.f32 %v841, 0.0
        %v858 = vadd.f32 %v842, 0.0
        %v859 = vadd.f32 %v843, 0.0
        %v860 = vadd.f32 %v844, 0.0
        %v861 = vadd.f32 %v845, 0.0
        %v862 = vadd.f32 %v846, 0.0
        %v863 = vadd.f32 %v847, 0.0
        %v864 = vadd.f32 %v848, 0.0
        %v865 = vld [vmem:[#allocation2 + $0x1] sm:$0xff]
        %v866 = vld [vmem:[#allocation2 + $0x9] sm:$0xff]
        %v867 = vld [vmem:[#allocation2 + $0x19] sm:$0xff]
        %v868 = vld [vmem:[#allocation2 + $0x21] sm:$0xff]
        %v869 = vld [vmem:[#allocation2 + $0x31] sm:$0xff]
        %v870 = vld [vmem:[#allocation2 + $0x39] sm:$0xff]
        %v871 = vld [vmem:[#allocation2 + $0x49] sm:$0xff]
        %v872 = vld [vmem:[#allocation2 + $0x51] sm:$0xff]
        %v873 = vld [vmem:[#allocation2 + $0x61] sm:$0xff]
        %v874 = vld [vmem:[#allocation2 + $0x69] sm:$0xff]
        %v875 = vld [vmem:[#allocation2 + $0x79] sm:$0xff]
        %v876 = vld [vmem:[#allocation2 + $0x81] sm:$0xff]
        %v877 = vld [vmem:[#allocation2 + $0x91] sm:$0xff]
        %v878 = vld [vmem:[#allocation2 + $0x99] sm:$0xff]
        %v879 = vld [vmem:[#allocation2 + $0xa9] sm:$0xff]
        %v880 = vld [vmem:[#allocation2 + $0xb1] sm:$0xff]
        %v881 = vlaneseq
        %v882 = vshrl.u32 %v881, 7
        %v883 = vsub.s32 1, %v882
        %v884 = vrot.slane %v793, %v883
        %v885 = vmul.f32 %v865, %v884
        %v886 = vmul.f32 %v866, %v884
        %v887 = vmul.f32 %v867, %v884
        %v888 = vmul.f32 %v868, %v884
        %v889 = vmul.f32 %v869, %v884
        %v890 = vmul.f32 %v870, %v884
        %v891 = vmul.f32 %v871, %v884
        %v892 = vmul.f32 %v872, %v884
        %v893 = vmul.f32 %v873, %v884
        %v894 = vmul.f32 %v874, %v884
        %v895 = vmul.f32 %v875, %v884
        %v896 = vmul.f32 %v876, %v884
        %v897 = vmul.f32 %v877, %v884
        %v898 = vmul.f32 %v878, %v884
        %v899 = vmul.f32 %v879, %v884
        %v900 = vmul.f32 %v880, %v884
        %v901 = vadd.f32 %v849, %v885
        %v902 = vadd.f32 %v850, %v886
        %v903 = vadd.f32 %v851, %v887
        %v904 = vadd.f32 %v852, %v888
        %v905 = vadd.f32 %v853, %v889
        %v906 = vadd.f32 %v854, %v890
        %v907 = vadd.f32 %v855, %v891
        %v908 = vadd.f32 %v856, %v892
        %v909 = vadd.f32 %v857, %v893
        %v910 = vadd.f32 %v858, %v894
        %v911 = vadd.f32 %v859, %v895
        %v912 = vadd.f32 %v860, %v896
        %v913 = vadd.f32 %v861, %v897
        %v914 = vadd.f32 %v862, %v898
        %v915 = vadd.f32 %v863, %v899
        %v916 = vadd.f32 %v864, %v900
        %v917 = vld [vmem:[#allocation2 + $0x2] sm:$0xff]
        %v918 = vld [vmem:[#allocation2 + $0xa] sm:$0xff]
        %v919 = vld [vmem:[#allocation2 + $0x1a] sm:$0xff]
        %v920 = vld [vmem:[#allocation2 + $0x22] sm:$0xff]
        %v921 = vld [vmem:[#allocation2 + $0x32] sm:$0xff]
        %v922 = vld [vmem:[#allocation2 + $0x3a] sm:$0xff]
        %v923 = vld [vmem:[#allocation2 + $0x4a] sm:$0xff]
        %v924 = vld [vmem:[#allocation2 + $0x52] sm:$0xff]
        %v925 = vld [vmem:[#allocation2 + $0x62] sm:$0xff]
        %v926 = vld [vmem:[#allocation2 + $0x6a] sm:$0xff]
        %v927 = vld [vmem:[#allocation2 + $0x7a] sm:$0xff]
        %v928 = vld [vmem:[#allocation2 + $0x82] sm:$0xff]
        %v929 = vld [vmem:[#allocation2 + $0x92] sm:$0xff]
        %v930 = vld [vmem:[#allocation2 + $0x9a] sm:$0xff]
        %v931 = vld [vmem:[#allocation2 + $0xaa] sm:$0xff]
        %v932 = vld [vmem:[#allocation2 + $0xb2] sm:$0xff]
        %v933 = vlaneseq
        %v934 = vshrl.u32 %v933, 7
        %v935 = vsub.s32 2, %v934
        %v936 = vrot.slane %v793, %v935
        %v937 = vmul.f32 %v917, %v936
        %v938 = vmul.f32 %v918, %v936
        %v939 = vmul.f32 %v919, %v936
        %v940 = vmul.f32 %v920, %v936
        %v941 = vmul.f32 %v921, %v936
        %v942 = vmul.f32 %v922, %v936
        %v943 = vmul.f32 %v923, %v936
        %v944 = vmul.f32 %v924, %v936
        %v945 = vmul.f32 %v925, %v936
        %v946 = vmul.f32 %v926, %v936
        %v947 = vmul.f32 %v927, %v936
        %v948 = vmul.f32 %v928, %v936
        %v949 = vmul.f32 %v929, %v936
        %v950 = vmul.f32 %v930, %v936
        %v951 = vmul.f32 %v931, %v936
        %v952 = vmul.f32 %v932, %v936
        %v953 = vadd.f32 %v901, %v937
        %v954 = vadd.f32 %v902, %v938
        %v955 = vadd.f32 %v903, %v939
        %v956 = vadd.f32 %v904, %v940
        %v957 = vadd.f32 %v905, %v941
        %v958 = vadd.f32 %v906, %v942
        %v959 = vadd.f32 %v907, %v943
        %v960 = vadd.f32 %v908, %v944
        %v961 = vadd.f32 %v909, %v945
        %v962 = vadd.f32 %v910, %v946
        %v963 = vadd.f32 %v911, %v947
        %v964 = vadd.f32 %v912, %v948
        %v965 = vadd.f32 %v913, %v949
        %v966 = vadd.f32 %v914, %v950
        %v967 = vadd.f32 %v915, %v951
        %v968 = vadd.f32 %v916, %v952
        %v969 = vld [vmem:[%s760] sm:$0xff]
        %v970 = vld [vmem:[%s760 + $0x8] sm:$0xff]
        %v971 = vld [vmem:[%s760 + $0x18] sm:$0xff]
        %v972 = vld [vmem:[%s760 + $0x20] sm:$0xff]
        %v973 = vld [vmem:[%s760 + $0x30] sm:$0xff]
        %v974 = vld [vmem:[%s760 + $0x38] sm:$0xff]
        %v975 = vld [vmem:[%s760 + $0x48] sm:$0xff]
        %v976 = vld [vmem:[%s760 + $0x50] sm:$0xff]
        %v977 = vld [vmem:[%s760 + $0x60] sm:$0xff]
        %v978 = vld [vmem:[%s760 + $0x68] sm:$0xff]
        %v979 = vld [vmem:[%s760 + $0x78] sm:$0xff]
        %v980 = vld [vmem:[%s760 + $0x80] sm:$0xff]
        %v981 = vld [vmem:[%s760 + $0x90] sm:$0xff]
        %v982 = vld [vmem:[%s760 + $0x98] sm:$0xff]
        %v983 = vld [vmem:[%s760 + $0xa8] sm:$0xff]
        %v984 = vld [vmem:[%s760 + $0xb0] sm:$0xff]
        %v985 = vlaneseq
        %v986 = vshrl.u32 %v985, 7
        %v987 = vsub.s32 3, %v986
        %v988 = vrot.slane %v793, %v987
        %v989 = vmul.f32 %v969, %v988
        %v990 = vmul.f32 %v970, %v988
        %v991 = vmul.f32 %v971, %v988
        %v992 = vmul.f32 %v972, %v988
        %v993 = vmul.f32 %v973, %v988
        %v994 = vmul.f32 %v974, %v988
        %v995 = vmul.f32 %v975, %v988
        %v996 = vmul.f32 %v976, %v988
        %v997 = vmul.f32 %v977, %v988
        %v998 = vmul.f32 %v978, %v988
        %v999 = vmul.f32 %v979, %v988
        %v1000 = vmul.f32 %v980, %v988
        %v1001 = vmul.f32 %v981, %v988
        %v1002 = vmul.f32 %v982, %v988
        %v1003 = vmul.f32 %v983, %v988
        %v1004 = vmul.f32 %v984, %v988
        %v1005 = vadd.f32 %v953, %v989
        %v1006 = vadd.f32 %v954, %v990
        %v1007 = vadd.f32 %v955, %v991
        %v1008 = vadd.f32 %v956, %v992
        %v1009 = vadd.f32 %v957, %v993
        %v1010 = vadd.f32 %v958, %v994
        %v1011 = vadd.f32 %v959, %v995
        %v1012 = vadd.f32 %v960, %v996
        %v1013 = vadd.f32 %v961, %v997
        %v1014 = vadd.f32 %v962, %v998
        %v1015 = vadd.f32 %v963, %v999
        %v1016 = vadd.f32 %v964, %v1000
        %v1017 = vadd.f32 %v965, %v1001
        %v1018 = vadd.f32 %v966, %v1002
        %v1019 = vadd.f32 %v967, %v1003
        %v1020 = vadd.f32 %v968, %v1004
        %v1021 = vld [vmem:[%s760 + $0x1] sm:$0xff]
        %v1022 = vld [vmem:[%s760 + $0x9] sm:$0xff]
        %v1023 = vld [vmem:[%s760 + $0x19] sm:$0xff]
        %v1024 = vld [vmem:[%s760 + $0x21] sm:$0xff]
        %v1025 = vld [vmem:[%s760 + $0x31] sm:$0xff]
        %v1026 = vld [vmem:[%s760 + $0x39] sm:$0xff]
        %v1027 = vld [vmem:[%s760 + $0x49] sm:$0xff]
        %v1028 = vld [vmem:[%s760 + $0x51] sm:$0xff]
        %v1029 = vld [vmem:[%s760 + $0x61] sm:$0xff]
        %v1030 = vld [vmem:[%s760 + $0x69] sm:$0xff]
        %v1031 = vld [vmem:[%s760 + $0x79] sm:$0xff]
        %v1032 = vld [vmem:[%s760 + $0x81] sm:$0xff]
        %v1033 = vld [vmem:[%s760 + $0x91] sm:$0xff]
        %v1034 = vld [vmem:[%s760 + $0x99] sm:$0xff]
        %v1035 = vld [vmem:[%s760 + $0xa9] sm:$0xff]
        %v1036 = vld [vmem:[%s760 + $0xb1] sm:$0xff]
        %v1037 = vlaneseq
        %v1038 = vshrl.u32 %v1037, 7
        %v1039 = vsub.s32 4, %v1038
        %v1040 = vrot.slane %v793, %v1039
        %v1041 = vmul.f32 %v1021, %v1040
        %v1042 = vmul.f32 %v1022, %v1040
        %v1043 = vmul.f32 %v1023, %v1040
        %v1044 = vmul.f32 %v1024, %v1040
        %v1045 = vmul.f32 %v1025, %v1040
        %v1046 = vmul.f32 %v1026, %v1040
        %v1047 = vmul.f32 %v1027, %v1040
        %v1048 = vmul.f32 %v1028, %v1040
        %v1049 = vmul.f32 %v1029, %v1040
        %v1050 = vmul.f32 %v1030, %v1040
        %v1051 = vmul.f32 %v1031, %v1040
        %v1052 = vmul.f32 %v1032, %v1040
        %v1053 = vmul.f32 %v1033, %v1040
        %v1054 = vmul.f32 %v1034, %v1040
        %v1055 = vmul.f32 %v1035, %v1040
        %v1056 = vmul.f32 %v1036, %v1040
        %v1057 = vadd.f32 %v1005, %v1041
        %v1058 = vadd.f32 %v1006, %v1042
        %v1059 = vadd.f32 %v1007, %v1043
        %v1060 = vadd.f32 %v1008, %v1044
        %v1061 = vadd.f32 %v1009, %v1045
        %v1062 = vadd.f32 %v1010, %v1046
        %v1063 = vadd.f32 %v1011, %v1047
        %v1064 = vadd.f32 %v1012, %v1048
        %v1065 = vadd.f32 %v1013, %v1049
        %v1066 = vadd.f32 %v1014, %v1050
        %v1067 = vadd.f32 %v1015, %v1051
        %v1068 = vadd.f32 %v1016, %v1052
        %v1069 = vadd.f32 %v1017, %v1053
        %v1070 = vadd.f32 %v1018, %v1054
        %v1071 = vadd.f32 %v1019, %v1055
        %v1072 = vadd.f32 %v1020, %v1056
        %v1073 = vld [vmem:[%s760 + $0x2] sm:$0xff]
        %v1074 = vld [vmem:[%s760 + $0xa] sm:$0xff]
        %v1075 = vld [vmem:[%s760 + $0x1a] sm:$0xff]
        %v1076 = vld [vmem:[%s760 + $0x22] sm:$0xff]
        %v1077 = vld [vmem:[%s760 + $0x32] sm:$0xff]
        %v1078 = vld [vmem:[%s760 + $0x3a] sm:$0xff]
        %v1079 = vld [vmem:[%s760 + $0x4a] sm:$0xff]
        %v1080 = vld [vmem:[%s760 + $0x52] sm:$0xff]
        %v1081 = vld [vmem:[%s760 + $0x62] sm:$0xff]
        %v1082 = vld [vmem:[%s760 + $0x6a] sm:$0xff]
        %v1083 = vld [vmem:[%s760 + $0x7a] sm:$0xff]
        %v1084 = vld [vmem:[%s760 + $0x82] sm:$0xff]
        %v1085 = vld [vmem:[%s760 + $0x92] sm:$0xff]
        %v1086 = vld [vmem:[%s760 + $0x9a] sm:$0xff]
        %v1087 = vld [vmem:[%s760 + $0xaa] sm:$0xff]
        %v1088 = vld [vmem:[%s760 + $0xb2] sm:$0xff]
        %v1089 = vlaneseq
        %v1090 = vshrl.u32 %v1089, 7
        %v1091 = vsub.s32 5, %v1090
        %v1092 = vrot.slane %v793, %v1091
        %v1093 = vmul.f32 %v1073, %v1092
        %v1094 = vmul.f32 %v1074, %v1092
        %v1095 = vmul.f32 %v1075, %v1092
        %v1096 = vmul.f32 %v1076, %v1092
        %v1097 = vmul.f32 %v1077, %v1092
        %v1098 = vmul.f32 %v1078, %v1092
        %v1099 = vmul.f32 %v1079, %v1092
        %v1100 = vmul.f32 %v1080, %v1092
        %v1101 = vmul.f32 %v1081, %v1092
        %v1102 = vmul.f32 %v1082, %v1092
        %v1103 = vmul.f32 %v1083, %v1092
        %v1104 = vmul.f32 %v1084, %v1092
        %v1105 = vmul.f32 %v1085, %v1092
        %v1106 = vmul.f32 %v1086, %v1092
        %v1107 = vmul.f32 %v1087, %v1092
        %v1108 = vmul.f32 %v1088, %v1092
        %v1109 = vadd.f32 %v1057, %v1093
        %v1110 = vadd.f32 %v1058, %v1094
        %v1111 = vadd.f32 %v1059, %v1095
        %v1112 = vadd.f32 %v1060, %v1096
        %v1113 = vadd.f32 %v1061, %v1097
        %v1114 = vadd.f32 %v1062, %v1098
        %v1115 = vadd.f32 %v1063, %v1099
        %v1116 = vadd.f32 %v1064, %v1100
        %v1117 = vadd.f32 %v1065, %v1101
        %v1118 = vadd.f32 %v1066, %v1102
        %v1119 = vadd.f32 %v1067, %v1103
        %v1120 = vadd.f32 %v1068, %v1104
        %v1121 = vadd.f32 %v1069, %v1105
        %v1122 = vadd.f32 %v1070, %v1106
        %v1123 = vadd.f32 %v1071, %v1107
        %v1124 = vadd.f32 %v1072, %v1108
        %s1125 = scalar_lea.vmem [#allocation2], 48
        %v1126 = vld [vmem:[%s1125] sm:$0xff]
        %v1127 = vld [vmem:[%s1125 + $0x8] sm:$0xff]
        %v1128 = vld [vmem:[%s1125 + $0x18] sm:$0xff]
        %v1129 = vld [vmem:[%s1125 + $0x20] sm:$0xff]
        %v1130 = vld [vmem:[%s1125 + $0x30] sm:$0xff]
        %v1131 = vld [vmem:[%s1125 + $0x38] sm:$0xff]
        %v1132 = vld [vmem:[%s1125 + $0x48] sm:$0xff]
        %v1133 = vld [vmem:[%s1125 + $0x50] sm:$0xff]
        %v1134 = vld [vmem:[%s1125 + $0x60] sm:$0xff]
        %v1135 = vld [vmem:[%s1125 + $0x68] sm:$0xff]
        %v1136 = vld [vmem:[%s1125 + $0x78] sm:$0xff]
        %v1137 = vld [vmem:[%s1125 + $0x80] sm:$0xff]
        %v1138 = vld [vmem:[%s1125 + $0x90] sm:$0xff]
        %v1139 = vld [vmem:[%s1125 + $0x98] sm:$0xff]
        %v1140 = vld [vmem:[%s1125 + $0xa8] sm:$0xff]
        %v1141 = vld [vmem:[%s1125 + $0xb0] sm:$0xff]
        %v1142 = vlaneseq
        %v1143 = vshrl.u32 %v1142, 7
        %v1144 = vsub.s32 6, %v1143
        %v1145 = vrot.slane %v793, %v1144
        %v1146 = vmul.f32 %v1126, %v1145
        %v1147 = vmul.f32 %v1127, %v1145
        %v1148 = vmul.f32 %v1128, %v1145
        %v1149 = vmul.f32 %v1129, %v1145
        %v1150 = vmul.f32 %v1130, %v1145
        %v1151 = vmul.f32 %v1131, %v1145
        %v1152 = vmul.f32 %v1132, %v1145
        %v1153 = vmul.f32 %v1133, %v1145
        %v1154 = vmul.f32 %v1134, %v1145
        %v1155 = vmul.f32 %v1135, %v1145
        %v1156 = vmul.f32 %v1136, %v1145
        %v1157 = vmul.f32 %v1137, %v1145
        %v1158 = vmul.f32 %v1138, %v1145
        %v1159 = vmul.f32 %v1139, %v1145
        %v1160 = vmul.f32 %v1140, %v1145
        %v1161 = vmul.f32 %v1141, %v1145
        %v1162 = vadd.f32 %v1109, %v1146
        %v1163 = vadd.f32 %v1110, %v1147
        %v1164 = vadd.f32 %v1111, %v1148
        %v1165 = vadd.f32 %v1112, %v1149
        %v1166 = vadd.f32 %v1113, %v1150
        %v1167 = vadd.f32 %v1114, %v1151
        %v1168 = vadd.f32 %v1115, %v1152
        %v1169 = vadd.f32 %v1116, %v1153
        %v1170 = vadd.f32 %v1117, %v1154
        %v1171 = vadd.f32 %v1118, %v1155
        %v1172 = vadd.f32 %v1119, %v1156
        %v1173 = vadd.f32 %v1120, %v1157
        %v1174 = vadd.f32 %v1121, %v1158
        %v1175 = vadd.f32 %v1122, %v1159
        %v1176 = vadd.f32 %v1123, %v1160
        %v1177 = vadd.f32 %v1124, %v1161
        %v1178 = vld [vmem:[%s1125 + $0x1] sm:$0xff]
        %v1179 = vld [vmem:[%s1125 + $0x9] sm:$0xff]
        %v1180 = vld [vmem:[%s1125 + $0x19] sm:$0xff]
        %v1181 = vld [vmem:[%s1125 + $0x21] sm:$0xff]
        %v1182 = vld [vmem:[%s1125 + $0x31] sm:$0xff]
        %v1183 = vld [vmem:[%s1125 + $0x39] sm:$0xff]
        %v1184 = vld [vmem:[%s1125 + $0x49] sm:$0xff]
        %v1185 = vld [vmem:[%s1125 + $0x51] sm:$0xff]
        %v1186 = vld [vmem:[%s1125 + $0x61] sm:$0xff]
        %v1187 = vld [vmem:[%s1125 + $0x69] sm:$0xff]
        %v1188 = vld [vmem:[%s1125 + $0x79] sm:$0xff]
        %v1189 = vld [vmem:[%s1125 + $0x81] sm:$0xff]
        %v1190 = vld [vmem:[%s1125 + $0x91] sm:$0xff]
        %v1191 = vld [vmem:[%s1125 + $0x99] sm:$0xff]
        %v1192 = vld [vmem:[%s1125 + $0xa9] sm:$0xff]
        %v1193 = vld [vmem:[%s1125 + $0xb1] sm:$0xff]
        %v1194 = vlaneseq
        %v1195 = vshrl.u32 %v1194, 7
        %v1196 = vsub.s32 7, %v1195
        %v1197 = vrot.slane %v793, %v1196
        %v1198 = vmul.f32 %v1178, %v1197
        %v1199 = vmul.f32 %v1179, %v1197
        %v1200 = vmul.f32 %v1180, %v1197
        %v1201 = vmul.f32 %v1181, %v1197
        %v1202 = vmul.f32 %v1182, %v1197
        %v1203 = vmul.f32 %v1183, %v1197
        %v1204 = vmul.f32 %v1184, %v1197
        %v1205 = vmul.f32 %v1185, %v1197
        %v1206 = vmul.f32 %v1186, %v1197
        %v1207 = vmul.f32 %v1187, %v1197
        %v1208 = vmul.f32 %v1188, %v1197
        %v1209 = vmul.f32 %v1189, %v1197
        %v1210 = vmul.f32 %v1190, %v1197
        %v1211 = vmul.f32 %v1191, %v1197
        %v1212 = vmul.f32 %v1192, %v1197
        %v1213 = vmul.f32 %v1193, %v1197
        %v1214 = vadd.f32 %v1162, %v1198
        %v1215 = vadd.f32 %v1163, %v1199
        %v1216 = vadd.f32 %v1164, %v1200
        %v1217 = vadd.f32 %v1165, %v1201
        %v1218 = vadd.f32 %v1166, %v1202
        %v1219 = vadd.f32 %v1167, %v1203
        %v1220 = vadd.f32 %v1168, %v1204
        %v1221 = vadd.f32 %v1169, %v1205
        %v1222 = vadd.f32 %v1170, %v1206
        %v1223 = vadd.f32 %v1171, %v1207
        %v1224 = vadd.f32 %v1172, %v1208
        %v1225 = vadd.f32 %v1173, %v1209
        %v1226 = vadd.f32 %v1174, %v1210
        %v1227 = vadd.f32 %v1175, %v1211
        %v1228 = vadd.f32 %v1176, %v1212
        %v1229 = vadd.f32 %v1177, %v1213
        %v1230 = vld [vmem:[%s1125 + $0x2] sm:$0xff]
        %v1231 = vld [vmem:[%s1125 + $0xa] sm:$0xff]
        %v1232 = vld [vmem:[%s1125 + $0x1a] sm:$0xff]
        %v1233 = vld [vmem:[%s1125 + $0x22] sm:$0xff]
        %v1234 = vld [vmem:[%s1125 + $0x32] sm:$0xff]
        %v1235 = vld [vmem:[%s1125 + $0x3a] sm:$0xff]
        %v1236 = vld [vmem:[%s1125 + $0x4a] sm:$0xff]
        %v1237 = vld [vmem:[%s1125 + $0x52] sm:$0xff]
        %v1238 = vld [vmem:[%s1125 + $0x62] sm:$0xff]
        %v1239 = vld [vmem:[%s1125 + $0x6a] sm:$0xff]
        %v1240 = vld [vmem:[%s1125 + $0x7a] sm:$0xff]
        %v1241 = vld [vmem:[%s1125 + $0x82] sm:$0xff]
        %v1242 = vld [vmem:[%s1125 + $0x92] sm:$0xff]
        %v1243 = vld [vmem:[%s1125 + $0x9a] sm:$0xff]
        %v1244 = vld [vmem:[%s1125 + $0xaa] sm:$0xff]
        %v1245 = vld [vmem:[%s1125 + $0xb2] sm:$0xff]
        %v1246 = vlaneseq
        %v1247 = vshrl.u32 %v1246, 7
        %v1248 = vsub.s32 0, %v1247
        %v1249 = vrot.slane %v794, %v1248
        %v1250 = vmul.f32 %v1230, %v1249
        %v1251 = vmul.f32 %v1231, %v1249
        %v1252 = vmul.f32 %v1232, %v1249
        %v1253 = vmul.f32 %v1233, %v1249
        %v1254 = vmul.f32 %v1234, %v1249
        %v1255 = vmul.f32 %v1235, %v1249
        %v1256 = vmul.f32 %v1236, %v1249
        %v1257 = vmul.f32 %v1237, %v1249
        %v1258 = vmul.f32 %v1238, %v1249
        %v1259 = vmul.f32 %v1239, %v1249
        %v1260 = vmul.f32 %v1240, %v1249
        %v1261 = vmul.f32 %v1241, %v1249
        %v1262 = vmul.f32 %v1242, %v1249
        %v1263 = vmul.f32 %v1243, %v1249
        %v1264 = vmul.f32 %v1244, %v1249
        %v1265 = vmul.f32 %v1245, %v1249
        %v1266 = vadd.f32 %v1214, %v1250
        %v1267 = vadd.f32 %v1215, %v1251
        %v1268 = vadd.f32 %v1216, %v1252
        %v1269 = vadd.f32 %v1217, %v1253
        %v1270 = vadd.f32 %v1218, %v1254
        %v1271 = vadd.f32 %v1219, %v1255
        %v1272 = vadd.f32 %v1220, %v1256
        %v1273 = vadd.f32 %v1221, %v1257
        %v1274 = vadd.f32 %v1222, %v1258
        %v1275 = vadd.f32 %v1223, %v1259
        %v1276 = vadd.f32 %v1224, %v1260
        %v1277 = vadd.f32 %v1225, %v1261
        %v1278 = vadd.f32 %v1226, %v1262
        %v1279 = vadd.f32 %v1227, %v1263
        %v1280 = vadd.f32 %v1228, %v1264
        %v1281 = vadd.f32 %v1229, %v1265
        %v1283 = vlaneseq
        %v1284 = vshrl.u32 %v1283, 7
        %v1285 = vsub.s32 0, %v1284
        %v1286 = vrot.slane %v795, %v1285
        %v1288 = vadd.f32 %v1266, %v1286
        %v1289 = vadd.f32 %v1267, %v1286
        %v1290 = vadd.f32 %v1268, %v1286
        %v1291 = vadd.f32 %v1269, %v1286
        %v1292 = vadd.f32 %v1270, %v1286
        %v1293 = vadd.f32 %v1271, %v1286
        %v1294 = vadd.f32 %v1272, %v1286
        %v1295 = vadd.f32 %v1273, %v1286
        %v1296 = vadd.f32 %v1274, %v1286
        %v1297 = vadd.f32 %v1275, %v1286
        %v1298 = vadd.f32 %v1276, %v1286
        %v1299 = vadd.f32 %v1277, %v1286
        %v1300 = vadd.f32 %v1278, %v1286
        %v1301 = vadd.f32 %v1279, %v1286
        %v1302 = vadd.f32 %v1280, %v1286
        %v1303 = vadd.f32 %v1281, %v1286
        %v1304 = vmax.f32 %v1288, 0.0
        %v1305 = vmax.f32 %v1289, 0.0
        %v1306 = vmax.f32 %v1290, 0.0
        %v1307 = vmax.f32 %v1291, 0.0
        %v1308 = vmax.f32 %v1292, 0.0
        %v1309 = vmax.f32 %v1293, 0.0
        %v1310 = vmax.f32 %v1294, 0.0
        %v1311 = vmax.f32 %v1295, 0.0
        %v1312 = vmax.f32 %v1296, 0.0
        %v1313 = vmax.f32 %v1297, 0.0
        %v1314 = vmax.f32 %v1298, 0.0
        %v1315 = vmax.f32 %v1299, 0.0
        %v1316 = vmax.f32 %v1300, 0.0
        %v1317 = vmax.f32 %v1301, 0.0
        %v1318 = vmax.f32 %v1302, 0.0
        %v1319 = vmax.f32 %v1303, 0.0
        %v1320 = vmin.f32 %v1304, 6.0
        %v1321 = vmin.f32 %v1305, 6.0
        %v1322 = vmin.f32 %v1306, 6.0
        %v1323 = vmin.f32 %v1307, 6.0
        %v1324 = vmin.f32 %v1308, 6.0
        %v1325 = vmin.f32 %v1309, 6.0
        %v1326 = vmin.f32 %v1310, 6.0
        %v1327 = vmin.f32 %v1311, 6.0
        %v1328 = vmin.f32 %v1312, 6.0
        %v1329 = vmin.f32 %v1313, 6.0
        %v1330 = vmin.f32 %v1314, 6.0
        %v1331 = vmin.f32 %v1315, 6.0
        %v1332 = vmin.f32 %v1316, 6.0
        %v1333 = vmin.f32 %v1317, 6.0
        %v1334 = vmin.f32 %v1318, 6.0
        %v1335 = vmin.f32 %v1319, 6.0
        %v1337 = vlaneseq
        %v1338 = vshrl.u32 %v1337, 7
        %v1339 = vsub.s32 0, %v1338
        %v1340 = vrot.slane %v812, %v1339
        %1342 = vmatprep.subr.mxu0 0.0
        %1343 = vmatpush1.msra.mxu0 %v811
        %1344 = vmatprep.subr.mxu0 0.0
        %1345 = vmatpush1.msra.mxu0 %v810
        %1346 = vmatprep.subr.mxu0 0.0
        %1347 = vmatpush1.msra.mxu0 %v809
        %1348 = vmatprep.subr.mxu0 0.0
        %1349 = vmatpush1.msra.mxu0 %v808
        %1350 = vmatprep.subr.mxu0 0.0
        %1351 = vmatpush1.msra.mxu0 %v807
        %1352 = vmatprep.subr.mxu0 0.0
        %1353 = vmatpush1.msra.mxu0 %v806
        %1354 = vmatprep.subr.mxu0 0.0
        %1355 = vmatpush1.msra.mxu0 %v805
        %1356 = vmatprep.subr.mxu0 0.0
        %1357 = vmatpush1.msra.mxu0 %v804
        %1358 = vmatprep.subr.mxu0 0.0
        %1359 = vmatpush1.msra.mxu0 %v803
        %1360 = vmatprep.subr.mxu0 0.0
        %1361 = vmatpush1.msra.mxu0 %v802
        %1362 = vmatprep.subr.mxu0 0.0
        %1363 = vmatpush1.msra.mxu0 %v801
        %1364 = vmatprep.subr.mxu0 0.0
        %1365 = vmatpush1.msra.mxu0 %v800
        %1366 = vmatprep.subr.mxu0 0.0
        %1367 = vmatpush1.msra.mxu0 %v799
        %1368 = vmatprep.subr.mxu0 0.0
        %1369 = vmatpush1.msra.mxu0 %v798
        %1370 = vmatprep.subr.mxu0 0.0
        %1371 = vmatpush1.msra.mxu0 %v797
        %1372 = vmatprep.subr.mxu0 0.0
        %1373 = vmatpush1.msra.mxu0 %v796
        %1374 = vmatprep.subr.mxu0 0.0
        %1375 = vmatpush2.msra.mxu0 0.0
        %1376 = vmatprep.subr.mxu0 0.0
        %1377 = vmatpush2.msra.mxu0 0.0
        %1378 = vmatprep.subr.mxu0 0.0
        %1379 = vmatpush2.msra.mxu0 0.0
        %1380 = vmatprep.subr.mxu0 0.0
        %1381 = vmatpush2.msra.mxu0 0.0
        %1382 = vmatprep.subr.mxu0 0.0
        %1383 = vmatpush2.msra.mxu0 0.0
        %1384 = vmatprep.subr.mxu0 0.0
        %1385 = vmatpush2.msra.mxu0 0.0
        %1386 = vmatprep.subr.mxu0 0.0
        %1387 = vmatpush2.msra.mxu0 0.0
        %1388 = vmatprep.subr.mxu0 0.0
        %1389 = vmatpush2.msra.mxu0 0.0
        %1390 = vmatprep.subr.mxu0 0.0
        %1391 = vmatpush2.msra.mxu0 0.0
        %1392 = vmatprep.subr.mxu0 0.0
        %1393 = vmatpush2.msra.mxu0 0.0
        %1394 = vmatprep.subr.mxu0 0.0
        %1395 = vmatpush2.msra.mxu0 0.0
        %1396 = vmatprep.subr.mxu0 0.0
        %1397 = vmatpush2.msra.mxu0 0.0
        %1398 = vmatprep.subr.mxu0 0.0
        %1399 = vmatpush2.msra.mxu0 0.0
        %1400 = vmatprep.subr.mxu0 0.0
        %1401 = vmatpush2.msra.mxu0 0.0
        %1402 = vmatprep.subr.mxu0 0.0
        %1403 = vmatpush2.msra.mxu0 0.0
        %1404 = vmatprep.subr.mxu0 0.0
        %1405 = vmatpush2.msra.mxu0 0.0
        %1406 = vmatprep.mubr.f32.mxu0 0.0
        %1407 = vmatmul.mubr.f32.gmra.mxu0 %v1320
        %v1408 = vpop.f32.mrf.mxu0
        %v1409 = vadd.f32 %v1340, %v1408
        %v1410 = vpop.f32.mrf.mxu0
        %1411 = vmatprep.mubr.f32.mxu0 0.0
        %1412 = vmatmul.mubr.f32.gmra.mxu0 %v1321
        %v1413 = vpop.f32.mrf.mxu0
        %v1414 = vadd.f32 %v1340, %v1413
        %v1415 = vpop.f32.mrf.mxu0
        %1416 = vmatprep.mubr.f32.mxu0 0.0
        %1417 = vmatmul.mubr.f32.gmra.mxu0 %v1322
        %v1418 = vpop.f32.mrf.mxu0
        %v1419 = vadd.f32 %v1340, %v1418
        %v1420 = vpop.f32.mrf.mxu0
        %1421 = vmatprep.mubr.f32.mxu0 0.0
        %1422 = vmatmul.mubr.f32.gmra.mxu0 %v1323
        %v1423 = vpop.f32.mrf.mxu0
        %v1424 = vadd.f32 %v1340, %v1423
        %v1425 = vpop.f32.mrf.mxu0
        %1426 = vmatprep.mubr.f32.mxu0 0.0
        %1427 = vmatmul.mubr.f32.gmra.mxu0 %v1324
        %v1428 = vpop.f32.mrf.mxu0
        %v1429 = vadd.f32 %v1340, %v1428
        %v1430 = vpop.f32.mrf.mxu0
        %1431 = vmatprep.mubr.f32.mxu0 0.0
        %1432 = vmatmul.mubr.f32.gmra.mxu0 %v1325
        %v1433 = vpop.f32.mrf.mxu0
        %v1434 = vadd.f32 %v1340, %v1433
        %v1435 = vpop.f32.mrf.mxu0
        %1436 = vmatprep.mubr.f32.mxu0 0.0
        %1437 = vmatmul.mubr.f32.gmra.mxu0 %v1326
        %v1438 = vpop.f32.mrf.mxu0
        %v1439 = vadd.f32 %v1340, %v1438
        %v1440 = vpop.f32.mrf.mxu0
        %1441 = vmatprep.mubr.f32.mxu0 0.0
        %1442 = vmatmul.mubr.f32.gmra.mxu0 %v1327
        %v1443 = vpop.f32.mrf.mxu0
        %v1444 = vadd.f32 %v1340, %v1443
        %v1445 = vpop.f32.mrf.mxu0
        %1446 = vmatprep.mubr.f32.mxu0 0.0
        %1447 = vmatmul.mubr.f32.gmra.mxu0 %v1328
        %v1448 = vpop.f32.mrf.mxu0
        %v1449 = vadd.f32 %v1340, %v1448
        %v1450 = vpop.f32.mrf.mxu0
        %1451 = vmatprep.mubr.f32.mxu0 0.0
        %1452 = vmatmul.mubr.f32.gmra.mxu0 %v1329
        %v1453 = vpop.f32.mrf.mxu0
        %v1454 = vadd.f32 %v1340, %v1453
        %v1455 = vpop.f32.mrf.mxu0
        %1456 = vmatprep.mubr.f32.mxu0 0.0
        %1457 = vmatmul.mubr.f32.gmra.mxu0 %v1330
        %v1458 = vpop.f32.mrf.mxu0
        %v1459 = vadd.f32 %v1340, %v1458
        %v1460 = vpop.f32.mrf.mxu0
        %1461 = vmatprep.mubr.f32.mxu0 0.0
        %1462 = vmatmul.mubr.f32.gmra.mxu0 %v1331
        %v1463 = vpop.f32.mrf.mxu0
        %v1464 = vadd.f32 %v1340, %v1463
        %v1465 = vpop.f32.mrf.mxu0
        %1466 = vmatprep.mubr.f32.mxu0 0.0
        %1467 = vmatmul.mubr.f32.gmra.mxu0 %v1332
        %v1468 = vpop.f32.mrf.mxu0
        %v1469 = vadd.f32 %v1340, %v1468
        %v1470 = vpop.f32.mrf.mxu0
        %1471 = vmatprep.mubr.f32.mxu0 0.0
        %1472 = vmatmul.mubr.f32.gmra.mxu0 %v1333
        %v1473 = vpop.f32.mrf.mxu0
        %v1474 = vadd.f32 %v1340, %v1473
        %v1475 = vpop.f32.mrf.mxu0
        %1476 = vmatprep.mubr.f32.mxu0 0.0
        %1477 = vmatmul.mubr.f32.gmra.mxu0 %v1334
        %v1478 = vpop.f32.mrf.mxu0
        %v1479 = vadd.f32 %v1340, %v1478
        %v1480 = vpop.f32.mrf.mxu0
        %1481 = vmatprep.mubr.f32.mxu0 0.0
        %1482 = vmatmul.mubr.f32.gmra.mxu0 %v1335
        %v1483 = vpop.f32.mrf.mxu0
        %v1484 = vadd.f32 %v1340, %v1483
        %v1485 = vpop.f32.mrf.mxu0
        %1486 = vdwg.mxu0
        %v1487 = vadd.f32 %v1409, %v277
        %v1488 = vadd.f32 %v1414, %v278
        %v1489 = vadd.f32 %v1419, %v279
        %v1490 = vadd.f32 %v1424, %v280
        %v1491 = vadd.f32 %v1429, %v281
        %v1492 = vadd.f32 %v1434, %v282
        %v1493 = vadd.f32 %v1439, %v283
        %v1494 = vadd.f32 %v1444, %v284
        %v1495 = vadd.f32 %v1449, %v285
        %v1496 = vadd.f32 %v1454, %v286
        %v1497 = vadd.f32 %v1459, %v287
        %v1498 = vadd.f32 %v1464, %v288
        %v1499 = vadd.f32 %v1469, %v289
        %v1500 = vadd.f32 %v1474, %v290
        %v1501 = vadd.f32 %v1479, %v291
        %v1502 = vadd.f32 %v1484, %v292
        %1503 = vst.msk [vmem:[%s271] sm:$0xff] %vm320, %v1487
        %1504 = vst.msk [vmem:[%s271 + $0x8] sm:$0xff] %vm320, %v1488
        %1505 = vst.msk [vmem:[%s271 + $0x10] sm:$0xff] %vm320, %v1489
        %1506 = vst.msk [vmem:[%s271 + $0x18] sm:$0xff] %vm320, %v1490
        %1507 = vst.msk [vmem:[%s271 + $0x20] sm:$0xff] %vm320, %v1491
        %1508 = vst.msk [vmem:[%s271 + $0x28] sm:$0xff] %vm320, %v1492
        %1509 = vst.msk [vmem:[%s271 + $0x30] sm:$0xff] %vm320, %v1493
        %1510 = vst.msk [vmem:[%s271 + $0x38] sm:$0xff] %vm320, %v1494
        %1511 = vst.msk [vmem:[%s271 + $0x40] sm:$0xff] %vm320, %v1495
        %1512 = vst.msk [vmem:[%s271 + $0x48] sm:$0xff] %vm320, %v1496
        %1513 = vst.msk [vmem:[%s271 + $0x50] sm:$0xff] %vm320, %v1497
        %1514 = vst.msk [vmem:[%s271 + $0x58] sm:$0xff] %vm320, %v1498
        %1515 = vst.msk [vmem:[%s271 + $0x60] sm:$0xff] %vm320, %v1499
        %1516 = vst.msk [vmem:[%s271 + $0x68] sm:$0xff] %vm320, %v1500
        %1517 = vst.msk [vmem:[%s271 + $0x70] sm:$0xff] %vm320, %v1501
        %1518 = vst.msk [vmem:[%s271 + $0x78] sm:$0xff] %vm320, %v1502
        %s1519 = scalar_lea.vmem [#allocation2], 192
        %v1520 = vld [vmem:[%s1519] sm:$0xff]
        %v1521 = vld [vmem:[%s1519 + $0x8] sm:$0xff]
        %v1522 = vld [vmem:[%s1519 + $0x18] sm:$0xff]
        %v1523 = vld [vmem:[%s1519 + $0x20] sm:$0xff]
        %v1524 = vld [vmem:[%s1519 + $0x30] sm:$0xff]
        %v1525 = vld [vmem:[%s1519 + $0x38] sm:$0xff]
        %v1526 = vld [vmem:[%s1519 + $0x48] sm:$0xff]
        %v1527 = vld [vmem:[%s1519 + $0x50] sm:$0xff]
        %v1528 = vld [vmem:[%s1519 + $0x60] sm:$0xff]
        %v1529 = vld [vmem:[%s1519 + $0x68] sm:$0xff]
        %v1530 = vld [vmem:[%s1519 + $0x78] sm:$0xff]
        %v1531 = vld [vmem:[%s1519 + $0x80] sm:$0xff]
        %v1532 = vld [vmem:[%s1519 + $0x90] sm:$0xff]
        %v1533 = vld [vmem:[%s1519 + $0x98] sm:$0xff]
        %v1534 = vld [vmem:[%s1519 + $0xa8] sm:$0xff]
        %v1535 = vld [vmem:[%s1519 + $0xb0] sm:$0xff]
        %v1536 = vmul.f32 %v1520, %v832
        %v1537 = vmul.f32 %v1521, %v832
        %v1538 = vmul.f32 %v1522, %v832
        %v1539 = vmul.f32 %v1523, %v832
        %v1540 = vmul.f32 %v1524, %v832
        %v1541 = vmul.f32 %v1525, %v832
        %v1542 = vmul.f32 %v1526, %v832
        %v1543 = vmul.f32 %v1527, %v832
        %v1544 = vmul.f32 %v1528, %v832
        %v1545 = vmul.f32 %v1529, %v832
        %v1546 = vmul.f32 %v1530, %v832
        %v1547 = vmul.f32 %v1531, %v832
        %v1548 = vmul.f32 %v1532, %v832
        %v1549 = vmul.f32 %v1533, %v832
        %v1550 = vmul.f32 %v1534, %v832
        %v1551 = vmul.f32 %v1535, %v832
        %v1552 = vadd.f32 %v1536, 0.0
        %v1553 = vadd.f32 %v1537, 0.0
        %v1554 = vadd.f32 %v1538, 0.0
        %v1555 = vadd.f32 %v1539, 0.0
        %v1556 = vadd.f32 %v1540, 0.0
        %v1557 = vadd.f32 %v1541, 0.0
        %v1558 = vadd.f32 %v1542, 0.0
        %v1559 = vadd.f32 %v1543, 0.0
        %v1560 = vadd.f32 %v1544, 0.0
        %v1561 = vadd.f32 %v1545, 0.0
        %v1562 = vadd.f32 %v1546, 0.0
        %v1563 = vadd.f32 %v1547, 0.0
        %v1564 = vadd.f32 %v1548, 0.0
        %v1565 = vadd.f32 %v1549, 0.0
        %v1566 = vadd.f32 %v1550, 0.0
        %v1567 = vadd.f32 %v1551, 0.0
        %v1568 = vld [vmem:[%s1519 + $0x1] sm:$0xff]
        %v1569 = vld [vmem:[%s1519 + $0x9] sm:$0xff]
        %v1570 = vld [vmem:[%s1519 + $0x19] sm:$0xff]
        %v1571 = vld [vmem:[%s1519 + $0x21] sm:$0xff]
        %v1572 = vld [vmem:[%s1519 + $0x31] sm:$0xff]
        %v1573 = vld [vmem:[%s1519 + $0x39] sm:$0xff]
        %v1574 = vld [vmem:[%s1519 + $0x49] sm:$0xff]
        %v1575 = vld [vmem:[%s1519 + $0x51] sm:$0xff]
        %v1576 = vld [vmem:[%s1519 + $0x61] sm:$0xff]
        %v1577 = vld [vmem:[%s1519 + $0x69] sm:$0xff]
        %v1578 = vld [vmem:[%s1519 + $0x79] sm:$0xff]
        %v1579 = vld [vmem:[%s1519 + $0x81] sm:$0xff]
        %v1580 = vld [vmem:[%s1519 + $0x91] sm:$0xff]
        %v1581 = vld [vmem:[%s1519 + $0x99] sm:$0xff]
        %v1582 = vld [vmem:[%s1519 + $0xa9] sm:$0xff]
        %v1583 = vld [vmem:[%s1519 + $0xb1] sm:$0xff]
        %v1584 = vmul.f32 %v1568, %v884
        %v1585 = vmul.f32 %v1569, %v884
        %v1586 = vmul.f32 %v1570, %v884
        %v1587 = vmul.f32 %v1571, %v884
        %v1588 = vmul.f32 %v1572, %v884
        %v1589 = vmul.f32 %v1573, %v884
        %v1590 = vmul.f32 %v1574, %v884
        %v1591 = vmul.f32 %v1575, %v884
        %v1592 = vmul.f32 %v1576, %v884
        %v1593 = vmul.f32 %v1577, %v884
        %v1594 = vmul.f32 %v1578, %v884
        %v1595 = vmul.f32 %v1579, %v884
        %v1596 = vmul.f32 %v1580, %v884
        %v1597 = vmul.f32 %v1581, %v884
        %v1598 = vmul.f32 %v1582, %v884
        %v1599 = vmul.f32 %v1583, %v884
        %v1600 = vadd.f32 %v1552, %v1584
        %v1601 = vadd.f32 %v1553, %v1585
        %v1602 = vadd.f32 %v1554, %v1586
        %v1603 = vadd.f32 %v1555, %v1587
        %v1604 = vadd.f32 %v1556, %v1588
        %v1605 = vadd.f32 %v1557, %v1589
        %v1606 = vadd.f32 %v1558, %v1590
        %v1607 = vadd.f32 %v1559, %v1591
        %v1608 = vadd.f32 %v1560, %v1592
        %v1609 = vadd.f32 %v1561, %v1593
        %v1610 = vadd.f32 %v1562, %v1594
        %v1611 = vadd.f32 %v1563, %v1595
        %v1612 = vadd.f32 %v1564, %v1596
        %v1613 = vadd.f32 %v1565, %v1597
        %v1614 = vadd.f32 %v1566, %v1598
        %v1615 = vadd.f32 %v1567, %v1599
        %v1616 = vld [vmem:[%s1519 + $0x2] sm:$0xff]
        %v1617 = vld [vmem:[%s1519 + $0xa] sm:$0xff]
        %v1618 = vld [vmem:[%s1519 + $0x1a] sm:$0xff]
        %v1619 = vld [vmem:[%s1519 + $0x22] sm:$0xff]
        %v1620 = vld [vmem:[%s1519 + $0x32] sm:$0xff]
        %v1621 = vld [vmem:[%s1519 + $0x3a] sm:$0xff]
        %v1622 = vld [vmem:[%s1519 + $0x4a] sm:$0xff]
        %v1623 = vld [vmem:[%s1519 + $0x52] sm:$0xff]
        %v1624 = vld [vmem:[%s1519 + $0x62] sm:$0xff]
        %v1625 = vld [vmem:[%s1519 + $0x6a] sm:$0xff]
        %v1626 = vld [vmem:[%s1519 + $0x7a] sm:$0xff]
        %v1627 = vld [vmem:[%s1519 + $0x82] sm:$0xff]
        %v1628 = vld [vmem:[%s1519 + $0x92] sm:$0xff]
        %v1629 = vld [vmem:[%s1519 + $0x9a] sm:$0xff]
        %v1630 = vld [vmem:[%s1519 + $0xaa] sm:$0xff]
        %v1631 = vld [vmem:[%s1519 + $0xb2] sm:$0xff]
        %v1632 = vmul.f32 %v1616, %v936
        %v1633 = vmul.f32 %v1617, %v936
        %v1634 = vmul.f32 %v1618, %v936
        %v1635 = vmul.f32 %v1619, %v936
        %v1636 = vmul.f32 %v1620, %v936
        %v1637 = vmul.f32 %v1621, %v936
        %v1638 = vmul.f32 %v1622, %v936
        %v1639 = vmul.f32 %v1623, %v936
        %v1640 = vmul.f32 %v1624, %v936
        %v1641 = vmul.f32 %v1625, %v936
        %v1642 = vmul.f32 %v1626, %v936
        %v1643 = vmul.f32 %v1627, %v936
        %v1644 = vmul.f32 %v1628, %v936
        %v1645 = vmul.f32 %v1629, %v936
        %v1646 = vmul.f32 %v1630, %v936
        %v1647 = vmul.f32 %v1631, %v936
        %v1648 = vadd.f32 %v1600, %v1632
        %v1649 = vadd.f32 %v1601, %v1633
        %v1650 = vadd.f32 %v1602, %v1634
        %v1651 = vadd.f32 %v1603, %v1635
        %v1652 = vadd.f32 %v1604, %v1636
        %v1653 = vadd.f32 %v1605, %v1637
        %v1654 = vadd.f32 %v1606, %v1638
        %v1655 = vadd.f32 %v1607, %v1639
        %v1656 = vadd.f32 %v1608, %v1640
        %v1657 = vadd.f32 %v1609, %v1641
        %v1658 = vadd.f32 %v1610, %v1642
        %v1659 = vadd.f32 %v1611, %v1643
        %v1660 = vadd.f32 %v1612, %v1644
        %v1661 = vadd.f32 %v1613, %v1645
        %v1662 = vadd.f32 %v1614, %v1646
        %v1663 = vadd.f32 %v1615, %v1647
        %s1664 = scalar_lea.vmem [#allocation2], 216
        %v1665 = vld [vmem:[%s1664] sm:$0xff]
        %v1666 = vld [vmem:[%s1664 + $0x8] sm:$0xff]
        %v1667 = vld [vmem:[%s1664 + $0x18] sm:$0xff]
        %v1668 = vld [vmem:[%s1664 + $0x20] sm:$0xff]
        %v1669 = vld [vmem:[%s1664 + $0x30] sm:$0xff]
        %v1670 = vld [vmem:[%s1664 + $0x38] sm:$0xff]
        %v1671 = vld [vmem:[%s1664 + $0x48] sm:$0xff]
        %v1672 = vld [vmem:[%s1664 + $0x50] sm:$0xff]
        %v1673 = vld [vmem:[%s1664 + $0x60] sm:$0xff]
        %v1674 = vld [vmem:[%s1664 + $0x68] sm:$0xff]
        %v1675 = vld [vmem:[%s1664 + $0x78] sm:$0xff]
        %v1676 = vld [vmem:[%s1664 + $0x80] sm:$0xff]
        %v1677 = vld [vmem:[%s1664 + $0x90] sm:$0xff]
        %v1678 = vld [vmem:[%s1664 + $0x98] sm:$0xff]
        %v1679 = vld [vmem:[%s1664 + $0xa8] sm:$0xff]
        %v1680 = vld [vmem:[%s1664 + $0xb0] sm:$0xff]
        %v1681 = vmul.f32 %v1665, %v988
        %v1682 = vmul.f32 %v1666, %v988
        %v1683 = vmul.f32 %v1667, %v988
        %v1684 = vmul.f32 %v1668, %v988
        %v1685 = vmul.f32 %v1669, %v988
        %v1686 = vmul.f32 %v1670, %v988
        %v1687 = vmul.f32 %v1671, %v988
        %v1688 = vmul.f32 %v1672, %v988
        %v1689 = vmul.f32 %v1673, %v988
        %v1690 = vmul.f32 %v1674, %v988
        %v1691 = vmul.f32 %v1675, %v988
        %v1692 = vmul.f32 %v1676, %v988
        %v1693 = vmul.f32 %v1677, %v988
        %v1694 = vmul.f32 %v1678, %v988
        %v1695 = vmul.f32 %v1679, %v988
        %v1696 = vmul.f32 %v1680, %v988
        %v1697 = vadd.f32 %v1648, %v1681
        %v1698 = vadd.f32 %v1649, %v1682
        %v1699 = vadd.f32 %v1650, %v1683
        %v1700 = vadd.f32 %v1651, %v1684
        %v1701 = vadd.f32 %v1652, %v1685
        %v1702 = vadd.f32 %v1653, %v1686
        %v1703 = vadd.f32 %v1654, %v1687
        %v1704 = vadd.f32 %v1655, %v1688
        %v1705 = vadd.f32 %v1656, %v1689
        %v1706 = vadd.f32 %v1657, %v1690
        %v1707 = vadd.f32 %v1658, %v1691
        %v1708 = vadd.f32 %v1659, %v1692
        %v1709 = vadd.f32 %v1660, %v1693
        %v1710 = vadd.f32 %v1661, %v1694
        %v1711 = vadd.f32 %v1662, %v1695
        %v1712 = vadd.f32 %v1663, %v1696
        %v1713 = vld [vmem:[%s1664 + $0x1] sm:$0xff]
        %v1714 = vld [vmem:[%s1664 + $0x9] sm:$0xff]
        %v1715 = vld [vmem:[%s1664 + $0x19] sm:$0xff]
        %v1716 = vld [vmem:[%s1664 + $0x21] sm:$0xff]
        %v1717 = vld [vmem:[%s1664 + $0x31] sm:$0xff]
        %v1718 = vld [vmem:[%s1664 + $0x39] sm:$0xff]
        %v1719 = vld [vmem:[%s1664 + $0x49] sm:$0xff]
        %v1720 = vld [vmem:[%s1664 + $0x51] sm:$0xff]
        %v1721 = vld [vmem:[%s1664 + $0x61] sm:$0xff]
        %v1722 = vld [vmem:[%s1664 + $0x69] sm:$0xff]
        %v1723 = vld [vmem:[%s1664 + $0x79] sm:$0xff]
        %v1724 = vld [vmem:[%s1664 + $0x81] sm:$0xff]
        %v1725 = vld [vmem:[%s1664 + $0x91] sm:$0xff]
        %v1726 = vld [vmem:[%s1664 + $0x99] sm:$0xff]
        %v1727 = vld [vmem:[%s1664 + $0xa9] sm:$0xff]
        %v1728 = vld [vmem:[%s1664 + $0xb1] sm:$0xff]
        %v1729 = vmul.f32 %v1713, %v1040
        %v1730 = vmul.f32 %v1714, %v1040
        %v1731 = vmul.f32 %v1715, %v1040
        %v1732 = vmul.f32 %v1716, %v1040
        %v1733 = vmul.f32 %v1717, %v1040
        %v1734 = vmul.f32 %v1718, %v1040
        %v1735 = vmul.f32 %v1719, %v1040
        %v1736 = vmul.f32 %v1720, %v1040
        %v1737 = vmul.f32 %v1721, %v1040
        %v1738 = vmul.f32 %v1722, %v1040
        %v1739 = vmul.f32 %v1723, %v1040
        %v1740 = vmul.f32 %v1724, %v1040
        %v1741 = vmul.f32 %v1725, %v1040
        %v1742 = vmul.f32 %v1726, %v1040
        %v1743 = vmul.f32 %v1727, %v1040
        %v1744 = vmul.f32 %v1728, %v1040
        %v1745 = vadd.f32 %v1697, %v1729
        %v1746 = vadd.f32 %v1698, %v1730
        %v1747 = vadd.f32 %v1699, %v1731
        %v1748 = vadd.f32 %v1700, %v1732
        %v1749 = vadd.f32 %v1701, %v1733
        %v1750 = vadd.f32 %v1702, %v1734
        %v1751 = vadd.f32 %v1703, %v1735
        %v1752 = vadd.f32 %v1704, %v1736
        %v1753 = vadd.f32 %v1705, %v1737
        %v1754 = vadd.f32 %v1706, %v1738
        %v1755 = vadd.f32 %v1707, %v1739
        %v1756 = vadd.f32 %v1708, %v1740
        %v1757 = vadd.f32 %v1709, %v1741
        %v1758 = vadd.f32 %v1710, %v1742
        %v1759 = vadd.f32 %v1711, %v1743
        %v1760 = vadd.f32 %v1712, %v1744
        %v1761 = vld [vmem:[%s1664 + $0x2] sm:$0xff]
        %v1762 = vld [vmem:[%s1664 + $0xa] sm:$0xff]
        %v1763 = vld [vmem:[%s1664 + $0x1a] sm:$0xff]
        %v1764 = vld [vmem:[%s1664 + $0x22] sm:$0xff]
        %v1765 = vld [vmem:[%s1664 + $0x32] sm:$0xff]
        %v1766 = vld [vmem:[%s1664 + $0x3a] sm:$0xff]
        %v1767 = vld [vmem:[%s1664 + $0x4a] sm:$0xff]
        %v1768 = vld [vmem:[%s1664 + $0x52] sm:$0xff]
        %v1769 = vld [vmem:[%s1664 + $0x62] sm:$0xff]
        %v1770 = vld [vmem:[%s1664 + $0x6a] sm:$0xff]
        %v1771 = vld [vmem:[%s1664 + $0x7a] sm:$0xff]
        %v1772 = vld [vmem:[%s1664 + $0x82] sm:$0xff]
        %v1773 = vld [vmem:[%s1664 + $0x92] sm:$0xff]
        %v1774 = vld [vmem:[%s1664 + $0x9a] sm:$0xff]
        %v1775 = vld [vmem:[%s1664 + $0xaa] sm:$0xff]
        %v1776 = vld [vmem:[%s1664 + $0xb2] sm:$0xff]
        %v1777 = vmul.f32 %v1761, %v1092
        %v1778 = vmul.f32 %v1762, %v1092
        %v1779 = vmul.f32 %v1763, %v1092
        %v1780 = vmul.f32 %v1764, %v1092
        %v1781 = vmul.f32 %v1765, %v1092
        %v1782 = vmul.f32 %v1766, %v1092
        %v1783 = vmul.f32 %v1767, %v1092
        %v1784 = vmul.f32 %v1768, %v1092
        %v1785 = vmul.f32 %v1769, %v1092
        %v1786 = vmul.f32 %v1770, %v1092
        %v1787 = vmul.f32 %v1771, %v1092
        %v1788 = vmul.f32 %v1772, %v1092
        %v1789 = vmul.f32 %v1773, %v1092
        %v1790 = vmul.f32 %v1774, %v1092
        %v1791 = vmul.f32 %v1775, %v1092
        %v1792 = vmul.f32 %v1776, %v1092
        %v1793 = vadd.f32 %v1745, %v1777
        %v1794 = vadd.f32 %v1746, %v1778
        %v1795 = vadd.f32 %v1747, %v1779
        %v1796 = vadd.f32 %v1748, %v1780
        %v1797 = vadd.f32 %v1749, %v1781
        %v1798 = vadd.f32 %v1750, %v1782
        %v1799 = vadd.f32 %v1751, %v1783
        %v1800 = vadd.f32 %v1752, %v1784
        %v1801 = vadd.f32 %v1753, %v1785
        %v1802 = vadd.f32 %v1754, %v1786
        %v1803 = vadd.f32 %v1755, %v1787
        %v1804 = vadd.f32 %v1756, %v1788
        %v1805 = vadd.f32 %v1757, %v1789
        %v1806 = vadd.f32 %v1758, %v1790
        %v1807 = vadd.f32 %v1759, %v1791
        %v1808 = vadd.f32 %v1760, %v1792
        %s1809 = scalar_lea.vmem [#allocation2], 240
        %v1810 = vld [vmem:[%s1809] sm:$0xff]
        %v1811 = vld [vmem:[%s1809 + $0x8] sm:$0xff]
        %v1812 = vld [vmem:[%s1809 + $0x18] sm:$0xff]
        %v1813 = vld [vmem:[%s1809 + $0x20] sm:$0xff]
        %v1814 = vld [vmem:[%s1809 + $0x30] sm:$0xff]
        %v1815 = vld [vmem:[%s1809 + $0x38] sm:$0xff]
        %v1816 = vld [vmem:[%s1809 + $0x48] sm:$0xff]
        %v1817 = vld [vmem:[%s1809 + $0x50] sm:$0xff]
        %v1818 = vld [vmem:[%s1809 + $0x60] sm:$0xff]
        %v1819 = vld [vmem:[%s1809 + $0x68] sm:$0xff]
        %v1820 = vld [vmem:[%s1809 + $0x78] sm:$0xff]
        %v1821 = vld [vmem:[%s1809 + $0x80] sm:$0xff]
        %v1822 = vld [vmem:[%s1809 + $0x90] sm:$0xff]
        %v1823 = vld [vmem:[%s1809 + $0x98] sm:$0xff]
        %v1824 = vld [vmem:[%s1809 + $0xa8] sm:$0xff]
        %v1825 = vld [vmem:[%s1809 + $0xb0] sm:$0xff]
        %v1826 = vmul.f32 %v1810, %v1145
        %v1827 = vmul.f32 %v1811, %v1145
        %v1828 = vmul.f32 %v1812, %v1145
        %v1829 = vmul.f32 %v1813, %v1145
        %v1830 = vmul.f32 %v1814, %v1145
        %v1831 = vmul.f32 %v1815, %v1145
        %v1832 = vmul.f32 %v1816, %v1145
        %v1833 = vmul.f32 %v1817, %v1145
        %v1834 = vmul.f32 %v1818, %v1145
        %v1835 = vmul.f32 %v1819, %v1145
        %v1836 = vmul.f32 %v1820, %v1145
        %v1837 = vmul.f32 %v1821, %v1145
        %v1838 = vmul.f32 %v1822, %v1145
        %v1839 = vmul.f32 %v1823, %v1145
        %v1840 = vmul.f32 %v1824, %v1145
        %v1841 = vmul.f32 %v1825, %v1145
        %v1842 = vadd.f32 %v1793, %v1826
        %v1843 = vadd.f32 %v1794, %v1827
        %v1844 = vadd.f32 %v1795, %v1828
        %v1845 = vadd.f32 %v1796, %v1829
        %v1846 = vadd.f32 %v1797, %v1830
        %v1847 = vadd.f32 %v1798, %v1831
        %v1848 = vadd.f32 %v1799, %v1832
        %v1849 = vadd.f32 %v1800, %v1833
        %v1850 = vadd.f32 %v1801, %v1834
        %v1851 = vadd.f32 %v1802, %v1835
        %v1852 = vadd.f32 %v1803, %v1836
        %v1853 = vadd.f32 %v1804, %v1837
        %v1854 = vadd.f32 %v1805, %v1838
        %v1855 = vadd.f32 %v1806, %v1839
        %v1856 = vadd.f32 %v1807, %v1840
        %v1857 = vadd.f32 %v1808, %v1841
        %v1858 = vld [vmem:[%s1809 + $0x1] sm:$0xff]
        %v1859 = vld [vmem:[%s1809 + $0x9] sm:$0xff]
        %v1860 = vld [vmem:[%s1809 + $0x19] sm:$0xff]
        %v1861 = vld [vmem:[%s1809 + $0x21] sm:$0xff]
        %v1862 = vld [vmem:[%s1809 + $0x31] sm:$0xff]
        %v1863 = vld [vmem:[%s1809 + $0x39] sm:$0xff]
        %v1864 = vld [vmem:[%s1809 + $0x49] sm:$0xff]
        %v1865 = vld [vmem:[%s1809 + $0x51] sm:$0xff]
        %v1866 = vld [vmem:[%s1809 + $0x61] sm:$0xff]
        %v1867 = vld [vmem:[%s1809 + $0x69] sm:$0xff]
        %v1868 = vld [vmem:[%s1809 + $0x79] sm:$0xff]
        %v1869 = vld [vmem:[%s1809 + $0x81] sm:$0xff]
        %v1870 = vld [vmem:[%s1809 + $0x91] sm:$0xff]
        %v1871 = vld [vmem:[%s1809 + $0x99] sm:$0xff]
        %v1872 = vld [vmem:[%s1809 + $0xa9] sm:$0xff]
        %v1873 = vld [vmem:[%s1809 + $0xb1] sm:$0xff]
        %v1874 = vmul.f32 %v1858, %v1197
        %v1875 = vmul.f32 %v1859, %v1197
        %v1876 = vmul.f32 %v1860, %v1197
        %v1877 = vmul.f32 %v1861, %v1197
        %v1878 = vmul.f32 %v1862, %v1197
        %v1879 = vmul.f32 %v1863, %v1197
        %v1880 = vmul.f32 %v1864, %v1197
        %v1881 = vmul.f32 %v1865, %v1197
        %v1882 = vmul.f32 %v1866, %v1197
        %v1883 = vmul.f32 %v1867, %v1197
        %v1884 = vmul.f32 %v1868, %v1197
        %v1885 = vmul.f32 %v1869, %v1197
        %v1886 = vmul.f32 %v1870, %v1197
        %v1887 = vmul.f32 %v1871, %v1197
        %v1888 = vmul.f32 %v1872, %v1197
        %v1889 = vmul.f32 %v1873, %v1197
        %v1890 = vadd.f32 %v1842, %v1874
        %v1891 = vadd.f32 %v1843, %v1875
        %v1892 = vadd.f32 %v1844, %v1876
        %v1893 = vadd.f32 %v1845, %v1877
        %v1894 = vadd.f32 %v1846, %v1878
        %v1895 = vadd.f32 %v1847, %v1879
        %v1896 = vadd.f32 %v1848, %v1880
        %v1897 = vadd.f32 %v1849, %v1881
        %v1898 = vadd.f32 %v1850, %v1882
        %v1899 = vadd.f32 %v1851, %v1883
        %v1900 = vadd.f32 %v1852, %v1884
        %v1901 = vadd.f32 %v1853, %v1885
        %v1902 = vadd.f32 %v1854, %v1886
        %v1903 = vadd.f32 %v1855, %v1887
        %v1904 = vadd.f32 %v1856, %v1888
        %v1905 = vadd.f32 %v1857, %v1889
        %v1906 = vld [vmem:[%s1809 + $0x2] sm:$0xff]
        %v1907 = vld [vmem:[%s1809 + $0xa] sm:$0xff]
        %v1908 = vld [vmem:[%s1809 + $0x1a] sm:$0xff]
        %v1909 = vld [vmem:[%s1809 + $0x22] sm:$0xff]
        %v1910 = vld [vmem:[%s1809 + $0x32] sm:$0xff]
        %v1911 = vld [vmem:[%s1809 + $0x3a] sm:$0xff]
        %v1912 = vld [vmem:[%s1809 + $0x4a] sm:$0xff]
        %v1913 = vld [vmem:[%s1809 + $0x52] sm:$0xff]
        %v1914 = vld [vmem:[%s1809 + $0x62] sm:$0xff]
        %v1915 = vld [vmem:[%s1809 + $0x6a] sm:$0xff]
        %v1916 = vld [vmem:[%s1809 + $0x7a] sm:$0xff]
        %v1917 = vld [vmem:[%s1809 + $0x82] sm:$0xff]
        %v1918 = vld [vmem:[%s1809 + $0x92] sm:$0xff]
        %v1919 = vld [vmem:[%s1809 + $0x9a] sm:$0xff]
        %v1920 = vld [vmem:[%s1809 + $0xaa] sm:$0xff]
        %v1921 = vld [vmem:[%s1809 + $0xb2] sm:$0xff]
        %v1922 = vmul.f32 %v1906, %v1249
        %v1923 = vmul.f32 %v1907, %v1249
        %v1924 = vmul.f32 %v1908, %v1249
        %v1925 = vmul.f32 %v1909, %v1249
        %v1926 = vmul.f32 %v1910, %v1249
        %v1927 = vmul.f32 %v1911, %v1249
        %v1928 = vmul.f32 %v1912, %v1249
        %v1929 = vmul.f32 %v1913, %v1249
        %v1930 = vmul.f32 %v1914, %v1249
        %v1931 = vmul.f32 %v1915, %v1249
        %v1932 = vmul.f32 %v1916, %v1249
        %v1933 = vmul.f32 %v1917, %v1249
        %v1934 = vmul.f32 %v1918, %v1249
        %v1935 = vmul.f32 %v1919, %v1249
        %v1936 = vmul.f32 %v1920, %v1249
        %v1937 = vmul.f32 %v1921, %v1249
        %v1938 = vadd.f32 %v1890, %v1922
        %v1939 = vadd.f32 %v1891, %v1923
        %v1940 = vadd.f32 %v1892, %v1924
        %v1941 = vadd.f32 %v1893, %v1925
        %v1942 = vadd.f32 %v1894, %v1926
        %v1943 = vadd.f32 %v1895, %v1927
        %v1944 = vadd.f32 %v1896, %v1928
        %v1945 = vadd.f32 %v1897, %v1929
        %v1946 = vadd.f32 %v1898, %v1930
        %v1947 = vadd.f32 %v1899, %v1931
        %v1948 = vadd.f32 %v1900, %v1932
        %v1949 = vadd.f32 %v1901, %v1933
        %v1950 = vadd.f32 %v1902, %v1934
        %v1951 = vadd.f32 %v1903, %v1935
        %v1952 = vadd.f32 %v1904, %v1936
        %v1953 = vadd.f32 %v1905, %v1937
        %v1954 = vadd.f32 %v1938, %v1286
        %v1955 = vadd.f32 %v1939, %v1286
        %v1956 = vadd.f32 %v1940, %v1286
        %v1957 = vadd.f32 %v1941, %v1286
        %v1958 = vadd.f32 %v1942, %v1286
        %v1959 = vadd.f32 %v1943, %v1286
        %v1960 = vadd.f32 %v1944, %v1286
        %v1961 = vadd.f32 %v1945, %v1286
        %v1962 = vadd.f32 %v1946, %v1286
        %v1963 = vadd.f32 %v1947, %v1286
        %v1964 = vadd.f32 %v1948, %v1286
        %v1965 = vadd.f32 %v1949, %v1286
        %v1966 = vadd.f32 %v1950, %v1286
        %v1967 = vadd.f32 %v1951, %v1286
        %v1968 = vadd.f32 %v1952, %v1286
        %v1969 = vadd.f32 %v1953, %v1286
        %v1970 = vmax.f32 %v1954, 0.0
        %v1971 = vmax.f32 %v1955, 0.0
        %v1972 = vmax.f32 %v1956, 0.0
        %v1973 = vmax.f32 %v1957, 0.0
        %v1974 = vmax.f32 %v1958, 0.0
        %v1975 = vmax.f32 %v1959, 0.0
        %v1976 = vmax.f32 %v1960, 0.0
        %v1977 = vmax.f32 %v1961, 0.0
        %v1978 = vmax.f32 %v1962, 0.0
        %v1979 = vmax.f32 %v1963, 0.0
        %v1980 = vmax.f32 %v1964, 0.0
        %v1981 = vmax.f32 %v1965, 0.0
        %v1982 = vmax.f32 %v1966, 0.0
        %v1983 = vmax.f32 %v1967, 0.0
        %v1984 = vmax.f32 %v1968, 0.0
        %v1985 = vmax.f32 %v1969, 0.0
        %v1986 = vmin.f32 %v1970, 6.0
        %v1987 = vmin.f32 %v1971, 6.0
        %v1988 = vmin.f32 %v1972, 6.0
        %v1989 = vmin.f32 %v1973, 6.0
        %v1990 = vmin.f32 %v1974, 6.0
        %v1991 = vmin.f32 %v1975, 6.0
        %v1992 = vmin.f32 %v1976, 6.0
        %v1993 = vmin.f32 %v1977, 6.0
        %v1994 = vmin.f32 %v1978, 6.0
        %v1995 = vmin.f32 %v1979, 6.0
        %v1996 = vmin.f32 %v1980, 6.0
        %v1997 = vmin.f32 %v1981, 6.0
        %v1998 = vmin.f32 %v1982, 6.0
        %v1999 = vmin.f32 %v1983, 6.0
        %v2000 = vmin.f32 %v1984, 6.0
        %v2001 = vmin.f32 %v1985, 6.0
        %2002 = vmatprep.subr.mxu0 0.0
        %2003 = vmatpush1.msra.mxu0 %v811
        %2004 = vmatprep.subr.mxu0 0.0
        %2005 = vmatpush1.msra.mxu0 %v810
        %2006 = vmatprep.subr.mxu0 0.0
        %2007 = vmatpush1.msra.mxu0 %v809
        %2008 = vmatprep.subr.mxu0 0.0
        %2009 = vmatpush1.msra.mxu0 %v808
        %2010 = vmatprep.subr.mxu0 0.0
        %2011 = vmatpush1.msra.mxu0 %v807
        %2012 = vmatprep.subr.mxu0 0.0
        %2013 = vmatpush1.msra.mxu0 %v806
        %2014 = vmatprep.subr.mxu0 0.0
        %2015 = vmatpush1.msra.mxu0 %v805
        %2016 = vmatprep.subr.mxu0 0.0
        %2017 = vmatpush1.msra.mxu0 %v804
        %2018 = vmatprep.subr.mxu0 0.0
        %2019 = vmatpush1.msra.mxu0 %v803
        %2020 = vmatprep.subr.mxu0 0.0
        %2021 = vmatpush1.msra.mxu0 %v802
        %2022 = vmatprep.subr.mxu0 0.0
        %2023 = vmatpush1.msra.mxu0 %v801
        %2024 = vmatprep.subr.mxu0 0.0
        %2025 = vmatpush1.msra.mxu0 %v800
        %2026 = vmatprep.subr.mxu0 0.0
        %2027 = vmatpush1.msra.mxu0 %v799
        %2028 = vmatprep.subr.mxu0 0.0
        %2029 = vmatpush1.msra.mxu0 %v798
        %2030 = vmatprep.subr.mxu0 0.0
        %2031 = vmatpush1.msra.mxu0 %v797
        %2032 = vmatprep.subr.mxu0 0.0
        %2033 = vmatpush1.msra.mxu0 %v796
        %2034 = vmatprep.subr.mxu0 0.0
        %2035 = vmatpush2.msra.mxu0 0.0
        %2036 = vmatprep.subr.mxu0 0.0
        %2037 = vmatpush2.msra.mxu0 0.0
        %2038 = vmatprep.subr.mxu0 0.0
        %2039 = vmatpush2.msra.mxu0 0.0
        %2040 = vmatprep.subr.mxu0 0.0
        %2041 = vmatpush2.msra.mxu0 0.0
        %2042 = vmatprep.subr.mxu0 0.0
        %2043 = vmatpush2.msra.mxu0 0.0
        %2044 = vmatprep.subr.mxu0 0.0
        %2045 = vmatpush2.msra.mxu0 0.0
        %2046 = vmatprep.subr.mxu0 0.0
        %2047 = vmatpush2.msra.mxu0 0.0
        %2048 = vmatprep.subr.mxu0 0.0
        %2049 = vmatpush2.msra.mxu0 0.0
        %2050 = vmatprep.subr.mxu0 0.0
        %2051 = vmatpush2.msra.mxu0 0.0
        %2052 = vmatprep.subr.mxu0 0.0
        %2053 = vmatpush2.msra.mxu0 0.0
        %2054 = vmatprep.subr.mxu0 0.0
        %2055 = vmatpush2.msra.mxu0 0.0
        %2056 = vmatprep.subr.mxu0 0.0
        %2057 = vmatpush2.msra.mxu0 0.0
        %2058 = vmatprep.subr.mxu0 0.0
        %2059 = vmatpush2.msra.mxu0 0.0
        %2060 = vmatprep.subr.mxu0 0.0
        %2061 = vmatpush2.msra.mxu0 0.0
        %2062 = vmatprep.subr.mxu0 0.0
        %2063 = vmatpush2.msra.mxu0 0.0
        %2064 = vmatprep.subr.mxu0 0.0
        %2065 = vmatpush2.msra.mxu0 0.0
        %2066 = vmatprep.mubr.f32.mxu0 0.0
        %2067 = vmatmul.mubr.f32.gmra.mxu0 %v1986
        %v2068 = vpop.f32.mrf.mxu0
        %v2069 = vadd.f32 %v1340, %v2068
        %v2070 = vpop.f32.mrf.mxu0
        %2071 = vmatprep.mubr.f32.mxu0 0.0
        %2072 = vmatmul.mubr.f32.gmra.mxu0 %v1987
        %v2073 = vpop.f32.mrf.mxu0
        %v2074 = vadd.f32 %v1340, %v2073
        %v2075 = vpop.f32.mrf.mxu0
        %2076 = vmatprep.mubr.f32.mxu0 0.0
        %2077 = vmatmul.mubr.f32.gmra.mxu0 %v1988
        %v2078 = vpop.f32.mrf.mxu0
        %v2079 = vadd.f32 %v1340, %v2078
        %v2080 = vpop.f32.mrf.mxu0
        %2081 = vmatprep.mubr.f32.mxu0 0.0
        %2082 = vmatmul.mubr.f32.gmra.mxu0 %v1989
        %v2083 = vpop.f32.mrf.mxu0
        %v2084 = vadd.f32 %v1340, %v2083
        %v2085 = vpop.f32.mrf.mxu0
        %2086 = vmatprep.mubr.f32.mxu0 0.0
        %2087 = vmatmul.mubr.f32.gmra.mxu0 %v1990
        %v2088 = vpop.f32.mrf.mxu0
        %v2089 = vadd.f32 %v1340, %v2088
        %v2090 = vpop.f32.mrf.mxu0
        %2091 = vmatprep.mubr.f32.mxu0 0.0
        %2092 = vmatmul.mubr.f32.gmra.mxu0 %v1991
        %v2093 = vpop.f32.mrf.mxu0
        %v2094 = vadd.f32 %v1340, %v2093
        %v2095 = vpop.f32.mrf.mxu0
        %2096 = vmatprep.mubr.f32.mxu0 0.0
        %2097 = vmatmul.mubr.f32.gmra.mxu0 %v1992
        %v2098 = vpop.f32.mrf.mxu0
        %v2099 = vadd.f32 %v1340, %v2098
        %v2100 = vpop.f32.mrf.mxu0
        %2101 = vmatprep.mubr.f32.mxu0 0.0
        %2102 = vmatmul.mubr.f32.gmra.mxu0 %v1993
        %v2103 = vpop.f32.mrf.mxu0
        %v2104 = vadd.f32 %v1340, %v2103
        %v2105 = vpop.f32.mrf.mxu0
        %2106 = vmatprep.mubr.f32.mxu0 0.0
        %2107 = vmatmul.mubr.f32.gmra.mxu0 %v1994
        %v2108 = vpop.f32.mrf.mxu0
        %v2109 = vadd.f32 %v1340, %v2108
        %v2110 = vpop.f32.mrf.mxu0
        %2111 = vmatprep.mubr.f32.mxu0 0.0
        %2112 = vmatmul.mubr.f32.gmra.mxu0 %v1995
        %v2113 = vpop.f32.mrf.mxu0
        %v2114 = vadd.f32 %v1340, %v2113
        %v2115 = vpop.f32.mrf.mxu0
        %2116 = vmatprep.mubr.f32.mxu0 0.0
        %2117 = vmatmul.mubr.f32.gmra.mxu0 %v1996
        %v2118 = vpop.f32.mrf.mxu0
        %v2119 = vadd.f32 %v1340, %v2118
        %v2120 = vpop.f32.mrf.mxu0
        %2121 = vmatprep.mubr.f32.mxu0 0.0
        %2122 = vmatmul.mubr.f32.gmra.mxu0 %v1997
        %v2123 = vpop.f32.mrf.mxu0
        %v2124 = vadd.f32 %v1340, %v2123
        %v2125 = vpop.f32.mrf.mxu0
        %2126 = vmatprep.mubr.f32.mxu0 0.0
        %2127 = vmatmul.mubr.f32.gmra.mxu0 %v1998
        %v2128 = vpop.f32.mrf.mxu0
        %v2129 = vadd.f32 %v1340, %v2128
        %v2130 = vpop.f32.mrf.mxu0
        %2131 = vmatprep.mubr.f32.mxu0 0.0
        %2132 = vmatmul.mubr.f32.gmra.mxu0 %v1999
        %v2133 = vpop.f32.mrf.mxu0
        %v2134 = vadd.f32 %v1340, %v2133
        %v2135 = vpop.f32.mrf.mxu0
        %2136 = vmatprep.mubr.f32.mxu0 0.0
        %2137 = vmatmul.mubr.f32.gmra.mxu0 %v2000
        %v2138 = vpop.f32.mrf.mxu0
        %v2139 = vadd.f32 %v1340, %v2138
        %v2140 = vpop.f32.mrf.mxu0
        %2141 = vmatprep.mubr.f32.mxu0 0.0
        %2142 = vmatmul.mubr.f32.gmra.mxu0 %v2001
        %v2143 = vpop.f32.mrf.mxu0
        %v2144 = vadd.f32 %v1340, %v2143
        %v2145 = vpop.f32.mrf.mxu0
        %2146 = vdwg.mxu0
        %v2147 = vadd.f32 %v2069, %v293
        %v2148 = vadd.f32 %v2074, %v294
        %v2149 = vadd.f32 %v2079, %v295
        %v2150 = vadd.f32 %v2084, %v296
        %v2151 = vadd.f32 %v2089, %v297
        %v2152 = vadd.f32 %v2094, %v298
        %v2153 = vadd.f32 %v2099, %v299
        %v2154 = vadd.f32 %v2104, %v300
        %v2155 = vadd.f32 %v2109, %v301
        %v2156 = vadd.f32 %v2114, %v302
        %v2157 = vadd.f32 %v2119, %v303
        %v2158 = vadd.f32 %v2124, %v304
        %v2159 = vadd.f32 %v2129, %v305
        %v2160 = vadd.f32 %v2134, %v306
        %v2161 = vadd.f32 %v2139, %v307
        %v2162 = vadd.f32 %v2144, %v308
        %2163 = vst.msk [vmem:[%s271 + $0x80] sm:$0xff] %vm320, %v2147
        %2164 = vst.msk [vmem:[%s271 + $0x88] sm:$0xff] %vm320, %v2148
        %2165 = vst.msk [vmem:[%s271 + $0x90] sm:$0xff] %vm320, %v2149
        %2166 = vst.msk [vmem:[%s271 + $0x98] sm:$0xff] %vm320, %v2150
        %2167 = vst.msk [vmem:[%s271 + $0xa0] sm:$0xff] %vm320, %v2151
        %2168 = vst.msk [vmem:[%s271 + $0xa8] sm:$0xff] %vm320, %v2152
        %2169 = vst.msk [vmem:[%s271 + $0xb0] sm:$0xff] %vm320, %v2153
        %2170 = vst.msk [vmem:[%s271 + $0xb8] sm:$0xff] %vm320, %v2154
        %2171 = vst.msk [vmem:[%s271 + $0xc0] sm:$0xff] %vm320, %v2155
        %2172 = vst.msk [vmem:[%s271 + $0xc8] sm:$0xff] %vm320, %v2156
        %2173 = vst.msk [vmem:[%s271 + $0xd0] sm:$0xff] %vm320, %v2157
        %2174 = vst.msk [vmem:[%s271 + $0xd8] sm:$0xff] %vm320, %v2158
        %2175 = vst.msk [vmem:[%s271 + $0xe0] sm:$0xff] %vm320, %v2159
        %2176 = vst.msk [vmem:[%s271 + $0xe8] sm:$0xff] %vm320, %v2160
        %2177 = vst.msk [vmem:[%s271 + $0xf0] sm:$0xff] %vm320, %v2161
        %2178 = vst.msk [vmem:[%s271 + $0xf8] sm:$0xff] %vm320, %v2162
        %s2179 = sand.u32 %s181, 1
        %s2180 = scalar_lea.sflag [#allocation4], %s2179
        %s2181 = sand.u32 %s181, 1
        %s2182 = smul.addr %s2181, 256
        %s2183 = scalar_lea.vmem [#allocation3], %s2182
        // Predicated region
        $region49: #{inverted_residual_forward.1} parent=47 // pred_check
          %p2184 = pneg %p191
        $region50: #{inverted_residual_forward.1} parent=47 // pred_check_branch
          %2186 = sbr.rel (%p2184) target = $region52
        $region51: #{inverted_residual_forward.1} parent=47 // pred_region
          %s2188 = ssub.s32 4096, 4096
          %2189 = vsyncadd %s2180, %s2188
          %s2190 = smul.addr %s21, 32
          %s2191 = smul.addr %s2190, 128
          %s2192 = scalar_lea.hbm %s7, %s2191
          %s2193 = sshll.u32 %s2183, 4
          %s2194 = int_to_ptr.vmem [resolvable:$true] %s2193
          %2199 = dma.vmem_to_hbm [thread:$0]  %s2194, 4096, %s2192, %s2180, 128, 128, 8
        $region52: #{inverted_residual_forward.1} parent=47 // pred_fallthru
          _
      $region48: #{inverted_residual_forward.1} parent=5 // pred_fallthru
        _
      %p2200 = scmp.le.s32.totalorder 2, %s16
      // Predicated region
      $region53: #{inverted_residual_forward.1} parent=5 // pred_check
        %p2201 = pneg %p2200
      $region54: #{inverted_residual_forward.1} parent=5 // pred_check_branch
        %2203 = sbr.rel (%p2201) target = $region56
      $region55: #{inverted_residual_forward.1} parent=5 // pred_region
        %s2204 = ssub.s32 %s16, 2
        // Predicated region
        $region57: #{inverted_residual_forward.1} parent=55 // pred_check
          %p2205 = pneg %p197
        $region58: #{inverted_residual_forward.1} parent=55 // pred_check_branch
          %2207 = sbr.rel (%p2205) target = $region60
        $region59: #{inverted_residual_forward.1} parent=55 // pred_region
          %s2208 = sand.u32 %s182, 1
          %s2209 = scalar_lea.sflag [#allocation4], %s2208
          %s2210 = sand.u32 %s182, 1
          %s2211 = smul.addr %s2210, 256
          %s2212 = scalar_lea.vmem [#allocation3], %s2211
          %2213 = dma.done %s2209, 4096
        $region60: #{inverted_residual_forward.1} parent=55 // pred_fallthru
          _
      $region56: #{inverted_residual_forward.1} parent=5 // pred_fallthru
        _
    $region6: #{inverted_residual_forward.1} parent=1 // loop_footer
      %s20 = sadd.s32 1, %s16
    $region7: #{inverted_residual_forward.1} parent=1 // loop_footer_branch
      %15 = sbr.rel target = $region3
    $region8: #{inverted_residual_forward.1} parent=1 // loop_exit
      _
    %2214 = vsyncpa [#allocation4], 1
    %s2215 = scalar_lea.sflag [#allocation4], 1
    %2216 = vsyncpa %s2215, 1

</llo_original>
